<compile_context>
chip_gen: v7x
topology: tpu7x:2x2x1
jax: 0.10.0
libtpu: 0.0.40
codegen_flags: <defaults>
</compile_context>

<pallas_src>
import jax
import jax.numpy as jnp
from jax.experimental import pallas as pl
from jax.experimental.pallas import tpu as pltpu

LATENT = 12
HIDDEN = 12          # LSTM hidden size (bidirectional -> 2*HIDDEN features)
HP = 128             # each gate / feature group padded to a full 128-lane block
G = 4 * HP           # packed gate width (i, f, g, o), lane-aligned


def encoder_kernel(x_ref, eps_ref, w_rec_ref, w_head_ref, out_ref):
    """Fused encoder forward.

    x_ref     : (T, BB, 1)   inputs, time-major, batch padded to a multiple of 8
    eps_ref   : (BB, 128)    reparameterization noise (lanes 0:LATENT real)
    w_rec_ref : (136, 512)   rows 0:128 = W_hh fwd (gate-padded);
                             row 128 = W_ih fwd; row 129 = b fwd;
                             row 130 = W_ih bwd; row 131 = b bwd
    w_head_ref: (136, 512)   cols 0:128 = emb_w (fwd half), 128:256 = emb_w (bwd half),
                             256:384 = mn_w, 384:512 = sd_w; row 128 = biases
    out_ref   : (BB, 384)    lanes 0:128 = out, 128:256 = mn, 256:384 = sd
    """
    T = x_ref.shape[0]

    whh = w_rec_ref[0:HP, :]                                   # (128, 512)
    wih_f = w_rec_ref[HP + 0:HP + 1, :].reshape(1, 1, G)
    b_f = w_rec_ref[HP + 1:HP + 2, :].reshape(1, 1, G)
    wih_b = w_rec_ref[HP + 2:HP + 3, :]                        # (1, 512)
    b_b = w_rec_ref[HP + 3:HP + 4, :]

    x = x_ref[...]                                             # (T, BB, 1)
    # input_size == 1 -> the input projection is an outer product; compute all
    # T steps at once (bias folded in) so the recurrence has no K=1 MXU dot and
    # no per-step slicing of x.
    xw = x * wih_f + b_f                                       # (T, BB, 512)

    def gates_to_hc(gates, c_prev, first):
        i = jax.nn.sigmoid(gates[:, 0 * HP:1 * HP])
        g = jnp.tanh(gates[:, 2 * HP:3 * HP])
        o = jax.nn.sigmoid(gates[:, 3 * HP:4 * HP])
        if first:
            c_new = i * g                                      # f * c0 == 0
        else:
            f = jax.nn.sigmoid(gates[:, 1 * HP:2 * HP])
            c_new = f * c_prev + i * g
        return o * jnp.tanh(c_new), c_new

    # ---- forward direction: statically unrolled recurrence ----
    h, c = gates_to_hc(xw[0], None, True)                      # h0 = c0 = 0
    for t in range(1, T):
        gates = xw[t] + jnp.dot(h, whh, preferred_element_type=jnp.float32)
        h, c = gates_to_hc(gates, c, False)
    h_fwd = h                                                  # (BB, 128), lanes 0:12 real

    # ---- backward direction, first step only (== output[:, -1, H:2H]);
    # h0 = c0 = 0 so the recurrent W_hh(bwd) term is identically zero. ----
    gates_b = x[T - 1] * wih_b + b_b                           # (BB, 512)
    h_bwd, _ = gates_to_hc(gates_b, None, True)

    # ---- heads (no lane concat: two dots summed into one accumulator) ----
    w_emb_f = w_head_ref[0:HP, 0:HP]
    w_emb_b = w_head_ref[0:HP, HP:2 * HP]
    w_mnsd = w_head_ref[0:HP, 2 * HP:4 * HP]
    emb_bias = w_head_ref[HP:HP + 1, 0:HP]
    mn_bias = w_head_ref[HP:HP + 1, HP:2 * HP]
    sd_bias = w_head_ref[HP:HP + 1, 2 * HP:3 * HP]

    emb = (jnp.dot(h_fwd, w_emb_f, preferred_element_type=jnp.float32)
           + jnp.dot(h_bwd, w_emb_b, preferred_element_type=jnp.float32)
           + emb_bias)
    emb = jnp.maximum(emb, 0.0)

    mnsd = jnp.dot(emb, w_mnsd, preferred_element_type=jnp.float32)   # (BB, 256)
    mn = mnsd[:, 0:HP] + mn_bias
    sd = mnsd[:, HP:2 * HP] + sd_bias

    # reparameterization: out = eps * exp(0.5 * sd) + mn ; single dense output slab
    out_ref[:, 0:HP] = eps_ref[...] * jnp.exp(sd * 0.5) + mn
    out_ref[:, HP:2 * HP] = mn
    out_ref[:, 2 * HP:3 * HP] = sd


def pack_params(params):
    """Pack PyTorch-shaped weights into two lane-aligned f32 slabs (136, 512)."""
    w_rec = jnp.zeros((HP + 8, G), jnp.float32)
    w_head = jnp.zeros((HP + 8, G), jnp.float32)

    for k in range(4):                       # gate order i, f, g, o (PyTorch)
        src = slice(k * HIDDEN, (k + 1) * HIDDEN)
        dst = slice(k * HP, k * HP + HIDDEN)
        w_rec = w_rec.at[0:HIDDEN, dst].set(params["whh_f"][:, src])
        w_rec = w_rec.at[HP + 0, dst].set(params["wih_f"][0, src])
        w_rec = w_rec.at[HP + 1, dst].set(params["b_f"][0, src])
        w_rec = w_rec.at[HP + 2, dst].set(params["wih_b"][0, src])
        w_rec = w_rec.at[HP + 3, dst].set(params["b_b"][0, src])
        # whh_b is provably dead (backward direction takes a single step from h0=0).

    w_head = w_head.at[0:HIDDEN, 0:LATENT].set(params["emb_w"][:HIDDEN, :])
    w_head = w_head.at[0:HIDDEN, HP:HP + LATENT].set(params["emb_w"][HIDDEN:, :])
    w_head = w_head.at[0:LATENT, 2 * HP:2 * HP + LATENT].set(params["mn_w"])
    w_head = w_head.at[0:LATENT, 3 * HP:3 * HP + LATENT].set(params["sd_w"])
    w_head = w_head.at[HP, 0:LATENT].set(params["emb_b"][0])
    w_head = w_head.at[HP, HP:HP + LATENT].set(params["mn_b"][0])
    w_head = w_head.at[HP, 2 * HP:2 * HP + LATENT].set(params["sd_b"][0])
    return w_rec, w_head


def _round_up(n, m):
    return ((n + m - 1) // m) * m


def encoder_forward(x, params, eps):
    """x: (B, T, 1) float32. Returns (out, mn, sd), each (B, LATENT)."""
    B, T, C = x.shape
    assert C == 1

    # Batch tiling: one lane-dense block when B is small; 256-row blocks spread
    # over a 'parallel' grid axis when B is large (uses both v7x TensorCores).
    if B <= 256:
        BB = _round_up(max(B, 8), 8)
    else:
        BB = 256
    Bp = _round_up(max(B, 8), BB)
    grid = (Bp // BB,)

    x_tb = jnp.transpose(x.astype(jnp.float32), (1, 0, 2))          # (T, B, 1)
    x_pad = jnp.zeros((T, Bp, 1), jnp.float32).at[:, :B, :].set(x_tb)
    eps_pad = jnp.zeros((Bp, HP), jnp.float32).at[:B, :LATENT].set(
        eps.astype(jnp.float32))
    w_rec, w_head = pack_params(params)

    fused = pl.pallas_call(
        encoder_kernel,
        out_shape=jax.ShapeDtypeStruct((Bp, 3 * HP), jnp.float32),
        grid=grid,
        in_specs=[
            pl.BlockSpec((T, BB, 1), lambda b: (0, b, 0)),
            pl.BlockSpec((BB, HP), lambda b: (b, 0)),
            pl.BlockSpec((HP + 8, G), lambda b: (0, 0)),
            pl.BlockSpec((HP + 8, G), lambda b: (0, 0)),
        ],
        out_specs=pl.BlockSpec((BB, 3 * HP), lambda b: (b, 0)),
        compiler_params=pltpu.CompilerParams(
            dimension_semantics=("parallel",)),
    )(x_pad, eps_pad, w_rec, w_head)

    out = fused[:B, 0:LATENT]
    mn = fused[:B, HP:HP + LATENT]
    sd = fused[:B, 2 * HP:2 * HP + LATENT]
    return out, mn, sd


def init_params(key):
    """Deterministic init matching PyTorch default shapes / ranges."""
    keys = jax.random.split(key, 16)
    k_lstm = 1.0 / jnp.sqrt(HIDDEN)          # PyTorch LSTM: U(-1/sqrt(H), 1/sqrt(H))

    def u(k, shape, bound):
        return jax.random.uniform(k, shape, jnp.float32, -bound, bound)

    params = {}
    # forward direction: weight_ih (4H, 1), weight_hh (4H, H), biases (4H,)
    params["wih_f"] = u(keys[0], (4 * HIDDEN, 1), k_lstm).T            # (1, 4H)
    params["whh_f"] = u(keys[1], (4 * HIDDEN, HIDDEN), k_lstm).T       # (H, 4H)
    params["b_f"] = (u(keys[2], (4 * HIDDEN,), k_lstm)
                     + u(keys[3], (4 * HIDDEN,), k_lstm)).reshape(1, 4 * HIDDEN)
    # reverse direction (whh_b only used by the pure-JAX reference; its
    # contribution is exactly zero because h0 = 0 for the single backward step)
    params["wih_b"] = u(keys[4], (4 * HIDDEN, 1), k_lstm).T
    params["whh_b"] = u(keys[5], (4 * HIDDEN, HIDDEN), k_lstm).T
    params["b_b"] = (u(keys[6], (4 * HIDDEN,), k_lstm)
                     + u(keys[7], (4 * HIDDEN,), k_lstm)).reshape(1, 4 * HIDDEN)

    # embedding Linear(24 -> 12)
    k_emb = 1.0 / jnp.sqrt(2 * HIDDEN)
    params["emb_w"] = u(keys[8], (LATENT, 2 * HIDDEN), k_emb).T        # (24, 12)
    params["emb_b"] = u(keys[9], (LATENT,), k_emb).reshape(1, LATENT)

    # mn / sd Linear(12 -> 12)
    k_lin = 1.0 / jnp.sqrt(LATENT)
    params["mn_w"] = u(keys[10], (LATENT, LATENT), k_lin).T
    params["mn_b"] = u(keys[11], (LATENT,), k_lin).reshape(1, LATENT)
    params["sd_w"] = u(keys[12], (LATENT, LATENT), k_lin).T
    params["sd_b"] = u(keys[13], (LATENT,), k_lin).reshape(1, LATENT)
    return params


def encoder_ref(x, params, eps):
    """Pure-JAX reference with PyTorch semantics (for correctness check)."""
    B, T, _ = x.shape
    xs = x[:, :, 0].astype(jnp.float32)

    def cell(x_t, h, c, wih, whh, b):
        gates = x_t @ wih + h @ whh + b
        i = jax.nn.sigmoid(gates[:, 0 * HIDDEN:1 * HIDDEN])
        f = jax.nn.sigmoid(gates[:, 1 * HIDDEN:2 * HIDDEN])
        g = jnp.tanh(gates[:, 2 * HIDDEN:3 * HIDDEN])
        o = jax.nn.sigmoid(gates[:, 3 * HIDDEN:4 * HIDDEN])
        c_new = f * c + i * g
        return o * jnp.tanh(c_new), c_new

    h = jnp.zeros((B, HIDDEN), jnp.float32)
    c = jnp.zeros((B, HIDDEN), jnp.float32)
    for t in range(T):
        h, c = cell(xs[:, t:t + 1], h, c,
                    params["wih_f"], params["whh_f"], params["b_f"])
    z = jnp.zeros((B, HIDDEN), jnp.float32)
    h_b, _ = cell(xs[:, T - 1:T], z, z,
                  params["wih_b"], params["whh_b"], params["b_b"])
    feat = jnp.concatenate([h, h_b], axis=-1)
    emb = jnp.maximum(feat @ params["emb_w"] + params["emb_b"], 0.0)
    mn = emb @ params["mn_w"] + params["mn_b"]
    sd = emb @ params["sd_w"] + params["sd_b"]
    out = eps * jnp.exp(sd * 0.5) + mn
    return out, mn, sd


if __name__ == "__main__":
    key = jax.random.PRNGKey(0)
    k_x, k_eps, k_params = jax.random.split(key, 3)

    B, T = 2, 8
    x = jax.random.normal(k_x, (B, T, 1), jnp.float32)
    # TODO(synk): torch.normal inside forward is host RNG; eps is sampled with
    # jax.random here and passed into the kernel (reparam math stays in-kernel).
    eps = jax.random.normal(k_eps, (B, LATENT), jnp.float32)
    params = init_params(k_params)

    out, mn, sd = encoder_forward(x, params, eps)
    jax.block_until_ready((out, mn, sd))
    assert out.shape == (B, LATENT) and mn.shape == (B, LATENT) and sd.shape == (B, LATENT)

    out_r, mn_r, sd_r = encoder_ref(x, params, eps)
    assert jnp.allclose(out, out_r, atol=1e-4, rtol=1e-4)
    assert jnp.allclose(mn, mn_r, atol=1e-4, rtol=1e-4)
    assert jnp.allclose(sd, sd_r, atol=1e-4, rtol=1e-4)
    print("KERNEL_OK")
</pallas_src>

<mosaic_0001>
module attributes {stable_mosaic.version = 11 : i64} {
  func.func @encoder_kernel(%arg0: i32, %arg1: memref<8x8x1xf32, #tpu.memory_space<vmem>>, %arg2: memref<8x128xf32, #tpu.memory_space<vmem>>, %arg3: memref<136x512xf32, #tpu.memory_space<vmem>>, %arg4: memref<136x512xf32, #tpu.memory_space<vmem>>, %arg5: memref<8x384xf32, #tpu.memory_space<vmem>>) attributes {dimension_semantics = [#tpu.dimension_semantics<parallel>], iteration_bounds = array<i64: 1>, scalar_prefetch = 0 : i64, scratch_operands = 0 : i64, tpu.core_type = #tpu.core_type<tc>, window_params = [{transform_indices = @transform_0, window_bounds = array<i64: 8, 8, 1>}, {transform_indices = @transform_1, window_bounds = array<i64: 8, 128>}, {pipeline_mode = #tpu.pipeline_mode<synchronous>, transform_indices = @transform_2, window_bounds = array<i64: 136, 512>}, {pipeline_mode = #tpu.pipeline_mode<synchronous>, transform_indices = @transform_3, window_bounds = array<i64: 136, 512>}, {transform_indices = @transform_4, window_bounds = array<i64: 8, 384>}]} {
    %c0 = arith.constant 0 : index
    %c0_0 = arith.constant 0 : index
    %0 = vector.load %arg3[%c0, %c0_0] : memref<136x512xf32, #tpu.memory_space<vmem>>, vector<128x512xf32>
    %c128 = arith.constant 128 : index
    %c0_1 = arith.constant 0 : index
    %1 = vector.load %arg3[%c128, %c0_1] : memref<136x512xf32, #tpu.memory_space<vmem>>, vector<1x512xf32>
    %2 = vector.shape_cast %1 : vector<1x512xf32> to vector<1x1x512xf32>
    %c129 = arith.constant 129 : index
    %c0_2 = arith.constant 0 : index
    %3 = vector.load %arg3[%c129, %c0_2] : memref<136x512xf32, #tpu.memory_space<vmem>>, vector<1x512xf32>
    %4 = vector.shape_cast %3 : vector<1x512xf32> to vector<1x1x512xf32>
    %c130 = arith.constant 130 : index
    %c0_3 = arith.constant 0 : index
    %5 = vector.load %arg3[%c130, %c0_3] : memref<136x512xf32, #tpu.memory_space<vmem>>, vector<1x512xf32>
    %c131 = arith.constant 131 : index
    %c0_4 = arith.constant 0 : index
    %6 = vector.load %arg3[%c131, %c0_4] : memref<136x512xf32, #tpu.memory_space<vmem>>, vector<1x512xf32>
    %c0_5 = arith.constant 0 : index
    %c0_6 = arith.constant 0 : index
    %c0_7 = arith.constant 0 : index
    %7 = vector.load %arg1[%c0_5, %c0_6, %c0_7] : memref<8x8x1xf32, #tpu.memory_space<vmem>>, vector<8x8x1xf32>
    %8 = vector.broadcast %7 : vector<8x8x1xf32> to vector<8x8x512xf32>
    %9 = vector.broadcast %2 : vector<1x1x512xf32> to vector<8x8x512xf32>
    %10 = arith.mulf %8, %9 : vector<8x8x512xf32>
    %11 = vector.broadcast %4 : vector<1x1x512xf32> to vector<8x8x512xf32>
    %12 = arith.addf %10, %11 : vector<8x8x512xf32>
    %13 = vector.extract_strided_slice %12 {offsets = [0, 0, 0], sizes = [1, 8, 512], strides = [1, 1, 1]} : vector<8x8x512xf32> to vector<1x8x512xf32>
    %14 = vector.shape_cast %13 : vector<1x8x512xf32> to vector<8x512xf32>
    %15 = vector.extract_strided_slice %14 {offsets = [0, 0], sizes = [8, 128], strides = [1, 1]} : vector<8x512xf32> to vector<8x128xf32>
    %16 = arith.negf %15 : vector<8x128xf32>
    %17 = math.exp %16 : vector<8x128xf32>
    %cst = arith.constant 1.000000e+00 : f32
    %18 = vector.broadcast %cst : f32 to vector<8x128xf32>
    %19 = arith.addf %18, %17 : vector<8x128xf32>
    %20 = arith.divf %18, %19 : vector<8x128xf32>
    %21 = vector.extract_strided_slice %14 {offsets = [0, 256], sizes = [8, 128], strides = [1, 1]} : vector<8x512xf32> to vector<8x128xf32>
    %22 = math.tanh %21 : vector<8x128xf32>
    %23 = vector.extract_strided_slice %14 {offsets = [0, 384], sizes = [8, 128], strides = [1, 1]} : vector<8x512xf32> to vector<8x128xf32>
    %24 = arith.negf %23 : vector<8x128xf32>
    %25 = math.exp %24 : vector<8x128xf32>
    %cst_8 = arith.constant 1.000000e+00 : f32
    %26 = vector.broadcast %cst_8 : f32 to vector<8x128xf32>
    %27 = arith.addf %26, %25 : vector<8x128xf32>
    %28 = arith.divf %26, %27 : vector<8x128xf32>
    %29 = arith.mulf %20, %22 : vector<8x128xf32>
    %30 = math.tanh %29 : vector<8x128xf32>
    %31 = arith.mulf %28, %30 : vector<8x128xf32>
    %32 = vector.extract_strided_slice %12 {offsets = [1, 0, 0], sizes = [1, 8, 512], strides = [1, 1, 1]} : vector<8x8x512xf32> to vector<1x8x512xf32>
    %33 = vector.shape_cast %32 : vector<1x8x512xf32> to vector<8x512xf32>
    %cst_9 = arith.constant dense<0.000000e+00> : vector<8x512xf32>
    %34 = tpu.matmul %31, %0, %cst_9 {dimension_numbers = #tpu.dot_dimension_numbers<[1], [0], [0], [1], [0, 0, 1, 1], [], []>} : vector<8x128xf32>, vector<128x512xf32>, vector<8x512xf32> -> vector<8x512xf32>
    %35 = arith.addf %33, %34 : vector<8x512xf32>
    %36 = vector.extract_strided_slice %35 {offsets = [0, 0], sizes = [8, 128], strides = [1, 1]} : vector<8x512xf32> to vector<8x128xf32>
    %37 = arith.negf %36 : vector<8x128xf32>
    %38 = math.exp %37 : vector<8x128xf32>
    %cst_10 = arith.constant 1.000000e+00 : f32
    %39 = vector.broadcast %cst_10 : f32 to vector<8x128xf32>
    %40 = arith.addf %39, %38 : vector<8x128xf32>
    %41 = arith.divf %39, %40 : vector<8x128xf32>
    %42 = vector.extract_strided_slice %35 {offsets = [0, 256], sizes = [8, 128], strides = [1, 1]} : vector<8x512xf32> to vector<8x128xf32>
    %43 = math.tanh %42 : vector<8x128xf32>
    %44 = vector.extract_strided_slice %35 {offsets = [0, 384], sizes = [8, 128], strides = [1, 1]} : vector<8x512xf32> to vector<8x128xf32>
    %45 = arith.negf %44 : vector<8x128xf32>
    %46 = math.exp %45 : vector<8x128xf32>
    %cst_11 = arith.constant 1.000000e+00 : f32
    %47 = vector.broadcast %cst_11 : f32 to vector<8x128xf32>
    %48 = arith.addf %47, %46 : vector<8x128xf32>
    %49 = arith.divf %47, %48 : vector<8x128xf32>
    %50 = vector.extract_strided_slice %35 {offsets = [0, 128], sizes = [8, 128], strides = [1, 1]} : vector<8x512xf32> to vector<8x128xf32>
    %51 = arith.negf %50 : vector<8x128xf32>
    %52 = math.exp %51 : vector<8x128xf32>
    %cst_12 = arith.constant 1.000000e+00 : f32
    %53 = vector.broadcast %cst_12 : f32 to vector<8x128xf32>
    %54 = arith.addf %53, %52 : vector<8x128xf32>
    %55 = arith.divf %53, %54 : vector<8x128xf32>
    %56 = arith.mulf %55, %29 : vector<8x128xf32>
    %57 = arith.mulf %41, %43 : vector<8x128xf32>
    %58 = arith.addf %56, %57 : vector<8x128xf32>
    %59 = math.tanh %58 : vector<8x128xf32>
    %60 = arith.mulf %49, %59 : vector<8x128xf32>
    %61 = vector.extract_strided_slice %12 {offsets = [2, 0, 0], sizes = [1, 8, 512], strides = [1, 1, 1]} : vector<8x8x512xf32> to vector<1x8x512xf32>
    %62 = vector.shape_cast %61 : vector<1x8x512xf32> to vector<8x512xf32>
    %cst_13 = arith.constant dense<0.000000e+00> : vector<8x512xf32>
    %63 = tpu.matmul %60, %0, %cst_13 {dimension_numbers = #tpu.dot_dimension_numbers<[1], [0], [0], [1], [0, 0, 1, 1], [], []>} : vector<8x128xf32>, vector<128x512xf32>, vector<8x512xf32> -> vector<8x512xf32>
    %64 = arith.addf %62, %63 : vector<8x512xf32>
    %65 = vector.extract_strided_slice %64 {offsets = [0, 0], sizes = [8, 128], strides = [1, 1]} : vector<8x512xf32> to vector<8x128xf32>
    %66 = arith.negf %65 : vector<8x128xf32>
    %67 = math.exp %66 : vector<8x128xf32>
    %cst_14 = arith.constant 1.000000e+00 : f32
    %68 = vector.broadcast %cst_14 : f32 to vector<8x128xf32>
    %69 = arith.addf %68, %67 : vector<8x128xf32>
    %70 = arith.divf %68, %69 : vector<8x128xf32>
    %71 = vector.extract_strided_slice %64 {offsets = [0, 256], sizes = [8, 128], strides = [1, 1]} : vector<8x512xf32> to vector<8x128xf32>
    %72 = math.tanh %71 : vector<8x128xf32>
    %73 = vector.extract_strided_slice %64 {offsets = [0, 384], sizes = [8, 128], strides = [1, 1]} : vector<8x512xf32> to vector<8x128xf32>
    %74 = arith.negf %73 : vector<8x128xf32>
    %75 = math.exp %74 : vector<8x128xf32>
    %cst_15 = arith.constant 1.000000e+00 : f32
    %76 = vector.broadcast %cst_15 : f32 to vector<8x128xf32>
    %77 = arith.addf %76, %75 : vector<8x128xf32>
    %78 = arith.divf %76, %77 : vector<8x128xf32>
    %79 = vector.extract_strided_slice %64 {offsets = [0, 128], sizes = [8, 128], strides = [1, 1]} : vector<8x512xf32> to vector<8x128xf32>
    %80 = arith.negf %79 : vector<8x128xf32>
    %81 = math.exp %80 : vector<8x128xf32>
    %cst_16 = arith.constant 1.000000e+00 : f32
    %82 = vector.broadcast %cst_16 : f32 to vector<8x128xf32>
    %83 = arith.addf %82, %81 : vector<8x128xf32>
    %84 = arith.divf %82, %83 : vector<8x128xf32>
    %85 = arith.mulf %84, %58 : vector<8x128xf32>
    %86 = arith.mulf %70, %72 : vector<8x128xf32>
    %87 = arith.addf %85, %86 : vector<8x128xf32>
    %88 = math.tanh %87 : vector<8x128xf32>
    %89 = arith.mulf %78, %88 : vector<8x128xf32>
    %90 = vector.extract_strided_slice %12 {offsets = [3, 0, 0], sizes = [1, 8, 512], strides = [1, 1, 1]} : vector<8x8x512xf32> to vector<1x8x512xf32>
    %91 = vector.shape_cast %90 : vector<1x8x512xf32> to vector<8x512xf32>
    %cst_17 = arith.constant dense<0.000000e+00> : vector<8x512xf32>
    %92 = tpu.matmul %89, %0, %cst_17 {dimension_numbers = #tpu.dot_dimension_numbers<[1], [0], [0], [1], [0, 0, 1, 1], [], []>} : vector<8x128xf32>, vector<128x512xf32>, vector<8x512xf32> -> vector<8x512xf32>
    %93 = arith.addf %91, %92 : vector<8x512xf32>
    %94 = vector.extract_strided_slice %93 {offsets = [0, 0], sizes = [8, 128], strides = [1, 1]} : vector<8x512xf32> to vector<8x128xf32>
    %95 = arith.negf %94 : vector<8x128xf32>
    %96 = math.exp %95 : vector<8x128xf32>
    %cst_18 = arith.constant 1.000000e+00 : f32
    %97 = vector.broadcast %cst_18 : f32 to vector<8x128xf32>
    %98 = arith.addf %97, %96 : vector<8x128xf32>
    %99 = arith.divf %97, %98 : vector<8x128xf32>
    %100 = vector.extract_strided_slice %93 {offsets = [0, 256], sizes = [8, 128], strides = [1, 1]} : vector<8x512xf32> to vector<8x128xf32>
    %101 = math.tanh %100 : vector<8x128xf32>
    %102 = vector.extract_strided_slice %93 {offsets = [0, 384], sizes = [8, 128], strides = [1, 1]} : vector<8x512xf32> to vector<8x128xf32>
    %103 = arith.negf %102 : vector<8x128xf32>
    %104 = math.exp %103 : vector<8x128xf32>
    %cst_19 = arith.constant 1.000000e+00 : f32
    %105 = vector.broadcast %cst_19 : f32 to vector<8x128xf32>
    %106 = arith.addf %105, %104 : vector<8x128xf32>
    %107 = arith.divf %105, %106 : vector<8x128xf32>
    %108 = vector.extract_strided_slice %93 {offsets = [0, 128], sizes = [8, 128], strides = [1, 1]} : vector<8x512xf32> to vector<8x128xf32>
    %109 = arith.negf %108 : vector<8x128xf32>
    %110 = math.exp %109 : vector<8x128xf32>
    %cst_20 = arith.constant 1.000000e+00 : f32
    %111 = vector.broadcast %cst_20 : f32 to vector<8x128xf32>
    %112 = arith.addf %111, %110 : vector<8x128xf32>
    %113 = arith.divf %111, %112 : vector<8x128xf32>
    %114 = arith.mulf %113, %87 : vector<8x128xf32>
    %115 = arith.mulf %99, %101 : vector<8x128xf32>
    %116 = arith.addf %114, %115 : vector<8x128xf32>
    %117 = math.tanh %116 : vector<8x128xf32>
    %118 = arith.mulf %107, %117 : vector<8x128xf32>
    %119 = vector.extract_strided_slice %12 {offsets = [4, 0, 0], sizes = [1, 8, 512], strides = [1, 1, 1]} : vector<8x8x512xf32> to vector<1x8x512xf32>
    %120 = vector.shape_cast %119 : vector<1x8x512xf32> to vector<8x512xf32>
    %cst_21 = arith.constant dense<0.000000e+00> : vector<8x512xf32>
    %121 = tpu.matmul %118, %0, %cst_21 {dimension_numbers = #tpu.dot_dimension_numbers<[1], [0], [0], [1], [0, 0, 1, 1], [], []>} : vector<8x128xf32>, vector<128x512xf32>, vector<8x512xf32> -> vector<8x512xf32>
    %122 = arith.addf %120, %121 : vector<8x512xf32>
    %123 = vector.extract_strided_slice %122 {offsets = [0, 0], sizes = [8, 128], strides = [1, 1]} : vector<8x512xf32> to vector<8x128xf32>
    %124 = arith.negf %123 : vector<8x128xf32>
    %125 = math.exp %124 : vector<8x128xf32>
    %cst_22 = arith.constant 1.000000e+00 : f32
    %126 = vector.broadcast %cst_22 : f32 to vector<8x128xf32>
    %127 = arith.addf %126, %125 : vector<8x128xf32>
    %128 = arith.divf %126, %127 : vector<8x128xf32>
    %129 = vector.extract_strided_slice %122 {offsets = [0, 256], sizes = [8, 128], strides = [1, 1]} : vector<8x512xf32> to vector<8x128xf32>
    %130 = math.tanh %129 : vector<8x128xf32>
    %131 = vector.extract_strided_slice %122 {offsets = [0, 384], sizes = [8, 128], strides = [1, 1]} : vector<8x512xf32> to vector<8x128xf32>
    %132 = arith.negf %131 : vector<8x128xf32>
    %133 = math.exp %132 : vector<8x128xf32>
    %cst_23 = arith.constant 1.000000e+00 : f32
    %134 = vector.broadcast %cst_23 : f32 to vector<8x128xf32>
    %135 = arith.addf %134, %133 : vector<8x128xf32>
    %136 = arith.divf %134, %135 : vector<8x128xf32>
    %137 = vector.extract_strided_slice %122 {offsets = [0, 128], sizes = [8, 128], strides = [1, 1]} : vector<8x512xf32> to vector<8x128xf32>
    %138 = arith.negf %137 : vector<8x128xf32>
    %139 = math.exp %138 : vector<8x128xf32>
    %cst_24 = arith.constant 1.000000e+00 : f32
    %140 = vector.broadcast %cst_24 : f32 to vector<8x128xf32>
    %141 = arith.addf %140, %139 : vector<8x128xf32>
    %142 = arith.divf %140, %141 : vector<8x128xf32>
    %143 = arith.mulf %142, %116 : vector<8x128xf32>
    %144 = arith.mulf %128, %130 : vector<8x128xf32>
    %145 = arith.addf %143, %144 : vector<8x128xf32>
    %146 = math.tanh %145 : vector<8x128xf32>
    %147 = arith.mulf %136, %146 : vector<8x128xf32>
    %148 = vector.extract_strided_slice %12 {offsets = [5, 0, 0], sizes = [1, 8, 512], strides = [1, 1, 1]} : vector<8x8x512xf32> to vector<1x8x512xf32>
    %149 = vector.shape_cast %148 : vector<1x8x512xf32> to vector<8x512xf32>
    %cst_25 = arith.constant dense<0.000000e+00> : vector<8x512xf32>
    %150 = tpu.matmul %147, %0, %cst_25 {dimension_numbers = #tpu.dot_dimension_numbers<[1], [0], [0], [1], [0, 0, 1, 1], [], []>} : vector<8x128xf32>, vector<128x512xf32>, vector<8x512xf32> -> vector<8x512xf32>
    %151 = arith.addf %149, %150 : vector<8x512xf32>
    %152 = vector.extract_strided_slice %151 {offsets = [0, 0], sizes = [8, 128], strides = [1, 1]} : vector<8x512xf32> to vector<8x128xf32>
    %153 = arith.negf %152 : vector<8x128xf32>
    %154 = math.exp %153 : vector<8x128xf32>
    %cst_26 = arith.constant 1.000000e+00 : f32
    %155 = vector.broadcast %cst_26 : f32 to vector<8x128xf32>
    %156 = arith.addf %155, %154 : vector<8x128xf32>
    %157 = arith.divf %155, %156 : vector<8x128xf32>
    %158 = vector.extract_strided_slice %151 {offsets = [0, 256], sizes = [8, 128], strides = [1, 1]} : vector<8x512xf32> to vector<8x128xf32>
    %159 = math.tanh %158 : vector<8x128xf32>
    %160 = vector.extract_strided_slice %151 {offsets = [0, 384], sizes = [8, 128], strides = [1, 1]} : vector<8x512xf32> to vector<8x128xf32>
    %161 = arith.negf %160 : vector<8x128xf32>
    %162 = math.exp %161 : vector<8x128xf32>
    %cst_27 = arith.constant 1.000000e+00 : f32
    %163 = vector.broadcast %cst_27 : f32 to vector<8x128xf32>
    %164 = arith.addf %163, %162 : vector<8x128xf32>
    %165 = arith.divf %163, %164 : vector<8x128xf32>
    %166 = vector.extract_strided_slice %151 {offsets = [0, 128], sizes = [8, 128], strides = [1, 1]} : vector<8x512xf32> to vector<8x128xf32>
    %167 = arith.negf %166 : vector<8x128xf32>
    %168 = math.exp %167 : vector<8x128xf32>
    %cst_28 = arith.constant 1.000000e+00 : f32
    %169 = vector.broadcast %cst_28 : f32 to vector<8x128xf32>
    %170 = arith.addf %169, %168 : vector<8x128xf32>
    %171 = arith.divf %169, %170 : vector<8x128xf32>
    %172 = arith.mulf %171, %145 : vector<8x128xf32>
    %173 = arith.mulf %157, %159 : vector<8x128xf32>
    %174 = arith.addf %172, %173 : vector<8x128xf32>
    %175 = math.tanh %174 : vector<8x128xf32>
    %176 = arith.mulf %165, %175 : vector<8x128xf32>
    %177 = vector.extract_strided_slice %12 {offsets = [6, 0, 0], sizes = [1, 8, 512], strides = [1, 1, 1]} : vector<8x8x512xf32> to vector<1x8x512xf32>
    %178 = vector.shape_cast %177 : vector<1x8x512xf32> to vector<8x512xf32>
    %cst_29 = arith.constant dense<0.000000e+00> : vector<8x512xf32>
    %179 = tpu.matmul %176, %0, %cst_29 {dimension_numbers = #tpu.dot_dimension_numbers<[1], [0], [0], [1], [0, 0, 1, 1], [], []>} : vector<8x128xf32>, vector<128x512xf32>, vector<8x512xf32> -> vector<8x512xf32>
    %180 = arith.addf %178, %179 : vector<8x512xf32>
    %181 = vector.extract_strided_slice %180 {offsets = [0, 0], sizes = [8, 128], strides = [1, 1]} : vector<8x512xf32> to vector<8x128xf32>
    %182 = arith.negf %181 : vector<8x128xf32>
    %183 = math.exp %182 : vector<8x128xf32>
    %cst_30 = arith.constant 1.000000e+00 : f32
    %184 = vector.broadcast %cst_30 : f32 to vector<8x128xf32>
    %185 = arith.addf %184, %183 : vector<8x128xf32>
    %186 = arith.divf %184, %185 : vector<8x128xf32>
    %187 = vector.extract_strided_slice %180 {offsets = [0, 256], sizes = [8, 128], strides = [1, 1]} : vector<8x512xf32> to vector<8x128xf32>
    %188 = math.tanh %187 : vector<8x128xf32>
    %189 = vector.extract_strided_slice %180 {offsets = [0, 384], sizes = [8, 128], strides = [1, 1]} : vector<8x512xf32> to vector<8x128xf32>
    %190 = arith.negf %189 : vector<8x128xf32>
    %191 = math.exp %190 : vector<8x128xf32>
    %cst_31 = arith.constant 1.000000e+00 : f32
    %192 = vector.broadcast %cst_31 : f32 to vector<8x128xf32>
    %193 = arith.addf %192, %191 : vector<8x128xf32>
    %194 = arith.divf %192, %193 : vector<8x128xf32>
    %195 = vector.extract_strided_slice %180 {offsets = [0, 128], sizes = [8, 128], strides = [1, 1]} : vector<8x512xf32> to vector<8x128xf32>
    %196 = arith.negf %195 : vector<8x128xf32>
    %197 = math.exp %196 : vector<8x128xf32>
    %cst_32 = arith.constant 1.000000e+00 : f32
    %198 = vector.broadcast %cst_32 : f32 to vector<8x128xf32>
    %199 = arith.addf %198, %197 : vector<8x128xf32>
    %200 = arith.divf %198, %199 : vector<8x128xf32>
    %201 = arith.mulf %200, %174 : vector<8x128xf32>
    %202 = arith.mulf %186, %188 : vector<8x128xf32>
    %203 = arith.addf %201, %202 : vector<8x128xf32>
    %204 = math.tanh %203 : vector<8x128xf32>
    %205 = arith.mulf %194, %204 : vector<8x128xf32>
    %206 = vector.extract_strided_slice %12 {offsets = [7, 0, 0], sizes = [1, 8, 512], strides = [1, 1, 1]} : vector<8x8x512xf32> to vector<1x8x512xf32>
    %207 = vector.shape_cast %206 : vector<1x8x512xf32> to vector<8x512xf32>
    %cst_33 = arith.constant dense<0.000000e+00> : vector<8x512xf32>
    %208 = tpu.matmul %205, %0, %cst_33 {dimension_numbers = #tpu.dot_dimension_numbers<[1], [0], [0], [1], [0, 0, 1, 1], [], []>} : vector<8x128xf32>, vector<128x512xf32>, vector<8x512xf32> -> vector<8x512xf32>
    %209 = arith.addf %207, %208 : vector<8x512xf32>
    %210 = vector.extract_strided_slice %209 {offsets = [0, 0], sizes = [8, 128], strides = [1, 1]} : vector<8x512xf32> to vector<8x128xf32>
    %211 = arith.negf %210 : vector<8x128xf32>
    %212 = math.exp %211 : vector<8x128xf32>
    %cst_34 = arith.constant 1.000000e+00 : f32
    %213 = vector.broadcast %cst_34 : f32 to vector<8x128xf32>
    %214 = arith.addf %213, %212 : vector<8x128xf32>
    %215 = arith.divf %213, %214 : vector<8x128xf32>
    %216 = vector.extract_strided_slice %209 {offsets = [0, 256], sizes = [8, 128], strides = [1, 1]} : vector<8x512xf32> to vector<8x128xf32>
    %217 = math.tanh %216 : vector<8x128xf32>
    %218 = vector.extract_strided_slice %209 {offsets = [0, 384], sizes = [8, 128], strides = [1, 1]} : vector<8x512xf32> to vector<8x128xf32>
    %219 = arith.negf %218 : vector<8x128xf32>
    %220 = math.exp %219 : vector<8x128xf32>
    %cst_35 = arith.constant 1.000000e+00 : f32
    %221 = vector.broadcast %cst_35 : f32 to vector<8x128xf32>
    %222 = arith.addf %221, %220 : vector<8x128xf32>
    %223 = arith.divf %221, %222 : vector<8x128xf32>
    %224 = vector.extract_strided_slice %209 {offsets = [0, 128], sizes = [8, 128], strides = [1, 1]} : vector<8x512xf32> to vector<8x128xf32>
    %225 = arith.negf %224 : vector<8x128xf32>
    %226 = math.exp %225 : vector<8x128xf32>
    %cst_36 = arith.constant 1.000000e+00 : f32
    %227 = vector.broadcast %cst_36 : f32 to vector<8x128xf32>
    %228 = arith.addf %227, %226 : vector<8x128xf32>
    %229 = arith.divf %227, %228 : vector<8x128xf32>
    %230 = arith.mulf %229, %203 : vector<8x128xf32>
    %231 = arith.mulf %215, %217 : vector<8x128xf32>
    %232 = arith.addf %230, %231 : vector<8x128xf32>
    %233 = math.tanh %232 : vector<8x128xf32>
    %234 = arith.mulf %223, %233 : vector<8x128xf32>
    %235 = vector.extract_strided_slice %7 {offsets = [7, 0, 0], sizes = [1, 8, 1], strides = [1, 1, 1]} : vector<8x8x1xf32> to vector<1x8x1xf32>
    %236 = vector.shape_cast %235 : vector<1x8x1xf32> to vector<8x1xf32>
    %237 = vector.broadcast %236 : vector<8x1xf32> to vector<8x512xf32>
    %238 = vector.broadcast %5 : vector<1x512xf32> to vector<8x512xf32>
    %239 = arith.mulf %237, %238 : vector<8x512xf32>
    %240 = vector.broadcast %6 : vector<1x512xf32> to vector<8x512xf32>
    %241 = arith.addf %239, %240 : vector<8x512xf32>
    %242 = vector.extract_strided_slice %241 {offsets = [0, 0], sizes = [8, 128], strides = [1, 1]} : vector<8x512xf32> to vector<8x128xf32>
    %243 = arith.negf %242 : vector<8x128xf32>
    %244 = math.exp %243 : vector<8x128xf32>
    %cst_37 = arith.constant 1.000000e+00 : f32
    %245 = vector.broadcast %cst_37 : f32 to vector<8x128xf32>
    %246 = arith.addf %245, %244 : vector<8x128xf32>
    %247 = arith.divf %245, %246 : vector<8x128xf32>
    %248 = vector.extract_strided_slice %241 {offsets = [0, 256], sizes = [8, 128], strides = [1, 1]} : vector<8x512xf32> to vector<8x128xf32>
    %249 = math.tanh %248 : vector<8x128xf32>
    %250 = vector.extract_strided_slice %241 {offsets = [0, 384], sizes = [8, 128], strides = [1, 1]} : vector<8x512xf32> to vector<8x128xf32>
    %251 = arith.negf %250 : vector<8x128xf32>
    %252 = math.exp %251 : vector<8x128xf32>
    %cst_38 = arith.constant 1.000000e+00 : f32
    %253 = vector.broadcast %cst_38 : f32 to vector<8x128xf32>
    %254 = arith.addf %253, %252 : vector<8x128xf32>
    %255 = arith.divf %253, %254 : vector<8x128xf32>
    %256 = arith.mulf %247, %249 : vector<8x128xf32>
    %257 = math.tanh %256 : vector<8x128xf32>
    %258 = arith.mulf %255, %257 : vector<8x128xf32>
    %c0_39 = arith.constant 0 : index
    %c0_40 = arith.constant 0 : index
    %259 = vector.load %arg4[%c0_39, %c0_40] : memref<136x512xf32, #tpu.memory_space<vmem>>, vector<128x128xf32>
    %c0_41 = arith.constant 0 : index
    %c128_42 = arith.constant 128 : index
    %260 = vector.load %arg4[%c0_41, %c128_42] : memref<136x512xf32, #tpu.memory_space<vmem>>, vector<128x128xf32>
    %c0_43 = arith.constant 0 : index
    %c256 = arith.constant 256 : index
    %261 = vector.load %arg4[%c0_43, %c256] : memref<136x512xf32, #tpu.memory_space<vmem>>, vector<128x256xf32>
    %c128_44 = arith.constant 128 : index
    %c0_45 = arith.constant 0 : index
    %262 = vector.load %arg4[%c128_44, %c0_45] : memref<136x512xf32, #tpu.memory_space<vmem>>, vector<1x128xf32>
    %c128_46 = arith.constant 128 : index
    %c128_47 = arith.constant 128 : index
    %263 = vector.load %arg4[%c128_46, %c128_47] : memref<136x512xf32, #tpu.memory_space<vmem>>, vector<1x128xf32>
    %c128_48 = arith.constant 128 : index
    %c256_49 = arith.constant 256 : index
    %264 = vector.load %arg4[%c128_48, %c256_49] : memref<136x512xf32, #tpu.memory_space<vmem>>, vector<1x128xf32>
    %cst_50 = arith.constant dense<0.000000e+00> : vector<8x128xf32>
    %265 = tpu.matmul %234, %259, %cst_50 {dimension_numbers = #tpu.dot_dimension_numbers<[1], [0], [0], [1], [0, 0, 1, 1], [], []>} : vector<8x128xf32>, vector<128x128xf32>, vector<8x128xf32> -> vector<8x128xf32>
    %cst_51 = arith.constant dense<0.000000e+00> : vector<8x128xf32>
    %266 = tpu.matmul %258, %260, %cst_51 {dimension_numbers = #tpu.dot_dimension_numbers<[1], [0], [0], [1], [0, 0, 1, 1], [], []>} : vector<8x128xf32>, vector<128x128xf32>, vector<8x128xf32> -> vector<8x128xf32>
    %267 = arith.addf %265, %266 : vector<8x128xf32>
    %268 = vector.broadcast %262 : vector<1x128xf32> to vector<8x128xf32>
    %269 = arith.addf %267, %268 : vector<8x128xf32>
    %cst_52 = arith.constant 0.000000e+00 : f32
    %270 = vector.broadcast %cst_52 : f32 to vector<8x128xf32>
    %271 = arith.maximumf %269, %270 : vector<8x128xf32>
    %cst_53 = arith.constant dense<0.000000e+00> : vector<8x256xf32>
    %272 = tpu.matmul %271, %261, %cst_53 {dimension_numbers = #tpu.dot_dimension_numbers<[1], [0], [0], [1], [0, 0, 1, 1], [], []>} : vector<8x128xf32>, vector<128x256xf32>, vector<8x256xf32> -> vector<8x256xf32>
    %273 = vector.extract_strided_slice %272 {offsets = [0, 0], sizes = [8, 128], strides = [1, 1]} : vector<8x256xf32> to vector<8x128xf32>
    %274 = vector.broadcast %263 : vector<1x128xf32> to vector<8x128xf32>
    %275 = arith.addf %273, %274 : vector<8x128xf32>
    %276 = vector.extract_strided_slice %272 {offsets = [0, 128], sizes = [8, 128], strides = [1, 1]} : vector<8x256xf32> to vector<8x128xf32>
    %277 = vector.broadcast %264 : vector<1x128xf32> to vector<8x128xf32>
    %278 = arith.addf %276, %277 : vector<8x128xf32>
    %c0_54 = arith.constant 0 : index
    %c0_55 = arith.constant 0 : index
    %279 = vector.load %arg2[%c0_54, %c0_55] : memref<8x128xf32, #tpu.memory_space<vmem>>, vector<8x128xf32>
    %cst_56 = arith.constant 5.000000e-01 : f32
    %280 = vector.broadcast %cst_56 : f32 to vector<8x128xf32>
    %281 = arith.mulf %278, %280 : vector<8x128xf32>
    %282 = math.exp %281 : vector<8x128xf32>
    %283 = arith.mulf %279, %282 : vector<8x128xf32>
    %284 = arith.addf %283, %275 : vector<8x128xf32>
    %c0_57 = arith.constant 0 : index
    %c0_58 = arith.constant 0 : index
    %285 = vector.load %arg5[%c0_57, %c0_58] : memref<8x384xf32, #tpu.memory_space<vmem>>, vector<8x128xf32>
    tpu.vector_store %arg5[%c0_57, %c0_58], %284 {strides = array<i32>} : memref<8x384xf32, #tpu.memory_space<vmem>>, vector<8x128xf32>,
    %c0_59 = arith.constant 0 : index
    %c128_60 = arith.constant 128 : index
    %286 = vector.load %arg5[%c0_59, %c128_60] : memref<8x384xf32, #tpu.memory_space<vmem>>, vector<8x128xf32>
    tpu.vector_store %arg5[%c0_59, %c128_60], %275 {strides = array<i32>} : memref<8x384xf32, #tpu.memory_space<vmem>>, vector<8x128xf32>,
    %c0_61 = arith.constant 0 : index
    %c256_62 = arith.constant 256 : index
    %287 = vector.load %arg5[%c0_61, %c256_62] : memref<8x384xf32, #tpu.memory_space<vmem>>, vector<8x128xf32>
    tpu.vector_store %arg5[%c0_61, %c256_62], %278 {strides = array<i32>} : memref<8x384xf32, #tpu.memory_space<vmem>>, vector<8x128xf32>,
    return
  }
  func.func @transform_0(%arg0: i32) -> (i32, i32, i32) {
    %c0_i32 = arith.constant 0 : i32
    %c0_i32_0 = arith.constant 0 : i32
    %c0_i32_1 = arith.constant 0 : i32
    return %c0_i32, %arg0, %c0_i32_0 : i32, i32, i32
  }
  func.func @transform_1(%arg0: i32) -> (i32, i32) {
    %c0_i32 = arith.constant 0 : i32
    %c0_i32_0 = arith.constant 0 : i32
    return %arg0, %c0_i32 : i32, i32
  }
  func.func @transform_2(%arg0: i32) -> (i32, i32) {
    %c0_i32 = arith.constant 0 : i32
    %c0_i32_0 = arith.constant 0 : i32
    %c0_i32_1 = arith.constant 0 : i32
    return %c0_i32, %c0_i32_0 : i32, i32
  }
  func.func @transform_3(%arg0: i32) -> (i32, i32) {
    %c0_i32 = arith.constant 0 : i32
    %c0_i32_0 = arith.constant 0 : i32
    %c0_i32_1 = arith.constant 0 : i32
    return %c0_i32, %c0_i32_0 : i32, i32
  }
  func.func @transform_4(%arg0: i32) -> (i32, i32) {
    %c0_i32 = arith.constant 0 : i32
    %c0_i32_0 = arith.constant 0 : i32
    return %arg0, %c0_i32 : i32, i32
  }
}

</mosaic_0001>

<llo_original>
// kernel: tpu_custom_call.1
$region0: #{tpu_custom_call.1}
  #allocation0 [shape = 'u32[]', space=smem, size = 0x4, offset = 0x4, fixed_abs, tag = 'smem constant byte address 0x4 - core index']
  #allocation1 [shape = 'u32[144,128]{1,0:T(1,128)}', space=vmem, size = 0x12000, scoped, tag = 'internal scratch']
  %s0 = inlined_call_operand.vmem [shape: f32[8,8,1], index: 0, kind: input, shape index: {}]
  %s1 = inlined_call_operand.vmem [shape: f32[8,128], index: 1, kind: input, shape index: {}]
  %s2 = inlined_call_operand.hbm [shape: f32[136,512], index: 2, kind: input, shape index: {}]
  %s3 = inlined_call_operand.hbm [shape: f32[136,512], index: 3, kind: input, shape index: {}]
  %s4 = inlined_call_operand.hbm [shape: f32[8,384], index: 4, kind: output, shape index: {}]
  %s5 = sld [smem:[#allocation0]]
  $region34: #{tpu_custom_call.1} parent=0
    _
  %s7 = ssub.s32 1, %s5
  %s8 = scalar_select 0, %s7, %s5
  $region1: #{tpu_custom_call.1} parent=0
    #allocation2 [shape = 'u8[278528]{0}', space=vmem, size = 0x44000, scoped, tag = 'input window, operand 2, single buffered']
    #allocation3 [shape = 's32[1]{0}', space=sflag, size = 0x4, scoped, tag = 'scoped memory for tpu_custom_call.1']
    #allocation4 [shape = 's32[1]{0}', space=sflag, size = 0x4, scoped, tag = 'scoped memory for tpu_custom_call.1']
    #allocation5 [shape = 'u8[278528]{0}', space=vmem, size = 0x44000, scoped, tag = 'input window, operand 3, single buffered']
    #allocation6 [shape = 's32[1]{0}', space=sflag, size = 0x4, scoped, tag = 'scoped memory for tpu_custom_call.1']
    #allocation7 [shape = 'u8[12288]{0}', space=vmem, size = 0x3000, scoped, tag = 'output window, operand 0, single buffered']
    %9 = vsyncpa [#allocation3], 0
    %10 = vsyncpa [#allocation6], 0
    %11 = vsyncpa [#allocation4], 0
    // Predicated region
    $region2: #{tpu_custom_call.1} parent=1 // pred_check
      _
    $region3: #{tpu_custom_call.1} parent=1 // pred_check_branch
      %13 = sbr.rel (0) target = $region5
    $region4: #{tpu_custom_call.1} parent=1 // pred_region
      _
    $region5: #{tpu_custom_call.1} parent=1 // pred_fallthru
      _
    // Predicated region
    $region6: #{tpu_custom_call.1} parent=1 // pred_check
      _
    $region7: #{tpu_custom_call.1} parent=1 // pred_check_branch
      %15 = sbr.rel (0) target = $region9
    $region8: #{tpu_custom_call.1} parent=1 // pred_region
      _
    $region9: #{tpu_custom_call.1} parent=1 // pred_fallthru
      _
    // Predicated region
    $region10: #{tpu_custom_call.1} parent=1 // pred_check
      _
    $region11: #{tpu_custom_call.1} parent=1 // pred_check_branch
      %17 = sbr.rel (0) target = $region13
    $region12: #{tpu_custom_call.1} parent=1 // pred_region
      %s19 = ssub.s32 8704, 8704
      %20 = vsyncadd [#allocation3], %s19
      %s21 = sshll.u32 [#allocation2], 4
      %s22 = int_to_ptr.vmem [resolvable:$true] %s21
      %27 = dma.hbm_to_vmem [thread:$0]  %s2, 8704, %s22, [#allocation3], 512, 512, 32
    $region13: #{tpu_custom_call.1} parent=1 // pred_fallthru
      _
    // Predicated region
    $region14: #{tpu_custom_call.1} parent=1 // pred_check
      _
    $region15: #{tpu_custom_call.1} parent=1 // pred_check_branch
      %29 = sbr.rel (0) target = $region17
    $region16: #{tpu_custom_call.1} parent=1 // pred_region
      %s31 = ssub.s32 8704, 8704
      %32 = vsyncadd [#allocation6], %s31
      %s33 = sshll.u32 [#allocation5], 4
      %s34 = int_to_ptr.vmem [resolvable:$true] %s33
      %39 = dma.hbm_to_vmem [thread:$0]  %s3, 8704, %s34, [#allocation6], 512, 512, 32
    $region17: #{tpu_custom_call.1} parent=1 // pred_fallthru
      _
    // Predicated region
    $region18: #{tpu_custom_call.1} parent=1 // pred_check
      _
    $region19: #{tpu_custom_call.1} parent=1 // pred_check_branch
      %41 = sbr.rel (0) target = $region21
    $region20: #{tpu_custom_call.1} parent=1 // pred_region
      %42 = dma.done [#allocation3], 8704
    $region21: #{tpu_custom_call.1} parent=1 // pred_fallthru
      _
    // Predicated region
    $region22: #{tpu_custom_call.1} parent=1 // pred_check
      _
    $region23: #{tpu_custom_call.1} parent=1 // pred_check_branch
      %44 = sbr.rel (0) target = $region25
    $region24: #{tpu_custom_call.1} parent=1 // pred_region
      %45 = dma.done [#allocation6], 8704
    $region25: #{tpu_custom_call.1} parent=1 // pred_fallthru
      _
    %v46 = vld [vmem:[#allocation2] sm:$0xff]
    %v47 = vld [vmem:[#allocation2 + $0x8] sm:$0xff]
    %v48 = vld [vmem:[#allocation2 + $0x10] sm:$0xff]
    %v49 = vld [vmem:[#allocation2 + $0x18] sm:$0xff]
    %v50 = vld [vmem:[#allocation2 + $0x20] sm:$0xff]
    %v51 = vld [vmem:[#allocation2 + $0x28] sm:$0xff]
    %v52 = vld [vmem:[#allocation2 + $0x30] sm:$0xff]
    %v53 = vld [vmem:[#allocation2 + $0x38] sm:$0xff]
    %v54 = vld [vmem:[#allocation2 + $0x40] sm:$0xff]
    %v55 = vld [vmem:[#allocation2 + $0x48] sm:$0xff]
    %v56 = vld [vmem:[#allocation2 + $0x50] sm:$0xff]
    %v57 = vld [vmem:[#allocation2 + $0x58] sm:$0xff]
    %v58 = vld [vmem:[#allocation2 + $0x60] sm:$0xff]
    %v59 = vld [vmem:[#allocation2 + $0x68] sm:$0xff]
    %v60 = vld [vmem:[#allocation2 + $0x70] sm:$0xff]
    %v61 = vld [vmem:[#allocation2 + $0x78] sm:$0xff]
    %v62 = vld [vmem:[#allocation2 + $0x80] sm:$0xff]
    %v63 = vld [vmem:[#allocation2 + $0x88] sm:$0xff]
    %v64 = vld [vmem:[#allocation2 + $0x90] sm:$0xff]
    %v65 = vld [vmem:[#allocation2 + $0x98] sm:$0xff]
    %v66 = vld [vmem:[#allocation2 + $0xa0] sm:$0xff]
    %v67 = vld [vmem:[#allocation2 + $0xa8] sm:$0xff]
    %v68 = vld [vmem:[#allocation2 + $0xb0] sm:$0xff]
    %v69 = vld [vmem:[#allocation2 + $0xb8] sm:$0xff]
    %v70 = vld [vmem:[#allocation2 + $0xc0] sm:$0xff]
    %v71 = vld [vmem:[#allocation2 + $0xc8] sm:$0xff]
    %v72 = vld [vmem:[#allocation2 + $0xd0] sm:$0xff]
    %v73 = vld [vmem:[#allocation2 + $0xd8] sm:$0xff]
    %v74 = vld [vmem:[#allocation2 + $0xe0] sm:$0xff]
    %v75 = vld [vmem:[#allocation2 + $0xe8] sm:$0xff]
    %v76 = vld [vmem:[#allocation2 + $0xf0] sm:$0xff]
    %v77 = vld [vmem:[#allocation2 + $0xf8] sm:$0xff]
    %v78 = vld [vmem:[#allocation2 + $0x100] sm:$0xff]
    %v79 = vld [vmem:[#allocation2 + $0x108] sm:$0xff]
    %v80 = vld [vmem:[#allocation2 + $0x110] sm:$0xff]
    %v81 = vld [vmem:[#allocation2 + $0x118] sm:$0xff]
    %v82 = vld [vmem:[#allocation2 + $0x120] sm:$0xff]
    %v83 = vld [vmem:[#allocation2 + $0x128] sm:$0xff]
    %v84 = vld [vmem:[#allocation2 + $0x130] sm:$0xff]
    %v85 = vld [vmem:[#allocation2 + $0x138] sm:$0xff]
    %v86 = vld [vmem:[#allocation2 + $0x140] sm:$0xff]
    %v87 = vld [vmem:[#allocation2 + $0x148] sm:$0xff]
    %v88 = vld [vmem:[#allocation2 + $0x150] sm:$0xff]
    %v89 = vld [vmem:[#allocation2 + $0x158] sm:$0xff]
    %v90 = vld [vmem:[#allocation2 + $0x160] sm:$0xff]
    %v91 = vld [vmem:[#allocation2 + $0x168] sm:$0xff]
    %v92 = vld [vmem:[#allocation2 + $0x170] sm:$0xff]
    %v93 = vld [vmem:[#allocation2 + $0x178] sm:$0xff]
    %v94 = vld [vmem:[#allocation2 + $0x180] sm:$0xff]
    %v95 = vld [vmem:[#allocation2 + $0x188] sm:$0xff]
    %v96 = vld [vmem:[#allocation2 + $0x190] sm:$0xff]
    %v97 = vld [vmem:[#allocation2 + $0x198] sm:$0xff]
    %v98 = vld [vmem:[#allocation2 + $0x1a0] sm:$0xff]
    %v99 = vld [vmem:[#allocation2 + $0x1a8] sm:$0xff]
    %v100 = vld [vmem:[#allocation2 + $0x1b0] sm:$0xff]
    %v101 = vld [vmem:[#allocation2 + $0x1b8] sm:$0xff]
    %v102 = vld [vmem:[#allocation2 + $0x1c0] sm:$0xff]
    %v103 = vld [vmem:[#allocation2 + $0x1c8] sm:$0xff]
    %v104 = vld [vmem:[#allocation2 + $0x1d0] sm:$0xff]
    %v105 = vld [vmem:[#allocation2 + $0x1d8] sm:$0xff]
    %v106 = vld [vmem:[#allocation2 + $0x1e0] sm:$0xff]
    %v107 = vld [vmem:[#allocation2 + $0x1e8] sm:$0xff]
    %v108 = vld [vmem:[#allocation2 + $0x1f0] sm:$0xff]
    %v109 = vld [vmem:[#allocation2 + $0x1f8] sm:$0xff]
    %s110 = scalar_lea.vmem [#allocation2], 512
    %v111 = vld [vmem:[%s110] ss:$8 sm:$0xf]
    %s112 = scalar_lea.vmem [#allocation2], 513
    %v113 = vld [vmem:[%s112] ss:$8 sm:$0xf]
    %s114 = scalar_lea.vmem [#allocation2], 514
    %v115 = vld [vmem:[%s114] ss:$8 sm:$0xf]
    %s116 = scalar_lea.vmem [#allocation2], 515
    %v117 = vld [vmem:[%s116] ss:$8 sm:$0xf]
    %v118 = vld [vmem:[%s0] sm:$0xff]
    %v119 = vld [vmem:[%s0 + $0x8] sm:$0xff]
    %v120 = vld [vmem:[%s0 + $0x10] sm:$0xff]
    %v121 = vld [vmem:[%s0 + $0x18] sm:$0xff]
    %v122 = vld [vmem:[%s0 + $0x20] sm:$0xff]
    %v123 = vld [vmem:[%s0 + $0x28] sm:$0xff]
    %v124 = vld [vmem:[%s0 + $0x30] sm:$0xff]
    %v125 = vld [vmem:[%s0 + $0x38] sm:$0xff]
    %127 = vset.pattern.permute.xlu0 0
    %128 = vperm.xlu0 %127, %v118
    %v129 = vpop.permute.xlu0 %128
    %132 = vset.pattern.permute.xlu0 0
    %133 = vperm.xlu0 %132, %v119
    %v134 = vpop.permute.xlu0 %133
    %137 = vset.pattern.permute.xlu0 0
    %138 = vperm.xlu0 %137, %v120
    %v139 = vpop.permute.xlu0 %138
    %142 = vset.pattern.permute.xlu0 0
    %143 = vperm.xlu0 %142, %v121
    %v144 = vpop.permute.xlu0 %143
    %147 = vset.pattern.permute.xlu0 0
    %148 = vperm.xlu0 %147, %v122
    %v149 = vpop.permute.xlu0 %148
    %152 = vset.pattern.permute.xlu0 0
    %153 = vperm.xlu0 %152, %v123
    %v154 = vpop.permute.xlu0 %153
    %157 = vset.pattern.permute.xlu0 0
    %158 = vperm.xlu0 %157, %v124
    %v159 = vpop.permute.xlu0 %158
    %162 = vset.pattern.permute.xlu0 0
    %163 = vperm.xlu0 %162, %v125
    %v164 = vpop.permute.xlu0 %163
    %v167 = vlaneseq
    %v168 = vshrl.u32 %v167, 7
    %v169 = vsub.s32 0, %v168
    %v170 = vrot.slane %v111, %v169
    %v171 = vlaneseq
    %v172 = vshrl.u32 %v171, 7
    %v173 = vsub.s32 1, %v172
    %v174 = vrot.slane %v111, %v173
    %v175 = vlaneseq
    %v176 = vshrl.u32 %v175, 7
    %v177 = vsub.s32 2, %v176
    %v178 = vrot.slane %v111, %v177
    %v179 = vlaneseq
    %v180 = vshrl.u32 %v179, 7
    %v181 = vsub.s32 3, %v180
    %v182 = vrot.slane %v111, %v181
    %v187 = vmul.f32 %v129, %v170
    %v188 = vmul.f32 %v129, %v178
    %v189 = vmul.f32 %v129, %v182
    %v190 = vmul.f32 %v134, %v170
    %v191 = vmul.f32 %v134, %v174
    %v192 = vmul.f32 %v134, %v178
    %v193 = vmul.f32 %v134, %v182
    %v194 = vmul.f32 %v139, %v170
    %v195 = vmul.f32 %v139, %v174
    %v196 = vmul.f32 %v139, %v178
    %v197 = vmul.f32 %v139, %v182
    %v198 = vmul.f32 %v144, %v170
    %v199 = vmul.f32 %v144, %v174
    %v200 = vmul.f32 %v144, %v178
    %v201 = vmul.f32 %v144, %v182
    %v202 = vmul.f32 %v149, %v170
    %v203 = vmul.f32 %v149, %v174
    %v204 = vmul.f32 %v149, %v178
    %v205 = vmul.f32 %v149, %v182
    %v206 = vmul.f32 %v154, %v170
    %v207 = vmul.f32 %v154, %v174
    %v208 = vmul.f32 %v154, %v178
    %v209 = vmul.f32 %v154, %v182
    %v210 = vmul.f32 %v159, %v170
    %v211 = vmul.f32 %v159, %v174
    %v212 = vmul.f32 %v159, %v178
    %v213 = vmul.f32 %v159, %v182
    %v214 = vmul.f32 %v164, %v170
    %v215 = vmul.f32 %v164, %v174
    %v216 = vmul.f32 %v164, %v178
    %v217 = vmul.f32 %v164, %v182
    %v219 = vlaneseq
    %v220 = vshrl.u32 %v219, 7
    %v221 = vsub.s32 0, %v220
    %v222 = vrot.slane %v113, %v221
    %v223 = vlaneseq
    %v224 = vshrl.u32 %v223, 7
    %v225 = vsub.s32 1, %v224
    %v226 = vrot.slane %v113, %v225
    %v227 = vlaneseq
    %v228 = vshrl.u32 %v227, 7
    %v229 = vsub.s32 2, %v228
    %v230 = vrot.slane %v113, %v229
    %v231 = vlaneseq
    %v232 = vshrl.u32 %v231, 7
    %v233 = vsub.s32 3, %v232
    %v234 = vrot.slane %v113, %v233
    %v239 = vadd.f32 %v187, %v222
    %v240 = vadd.f32 %v188, %v230
    %v241 = vadd.f32 %v189, %v234
    %v242 = vadd.f32 %v190, %v222
    %v243 = vadd.f32 %v191, %v226
    %v244 = vadd.f32 %v192, %v230
    %v245 = vadd.f32 %v193, %v234
    %v246 = vadd.f32 %v194, %v222
    %v247 = vadd.f32 %v195, %v226
    %v248 = vadd.f32 %v196, %v230
    %v249 = vadd.f32 %v197, %v234
    %v250 = vadd.f32 %v198, %v222
    %v251 = vadd.f32 %v199, %v226
    %v252 = vadd.f32 %v200, %v230
    %v253 = vadd.f32 %v201, %v234
    %v254 = vadd.f32 %v202, %v222
    %v255 = vadd.f32 %v203, %v226
    %v256 = vadd.f32 %v204, %v230
    %v257 = vadd.f32 %v205, %v234
    %v258 = vadd.f32 %v206, %v222
    %v259 = vadd.f32 %v207, %v226
    %v260 = vadd.f32 %v208, %v230
    %v261 = vadd.f32 %v209, %v234
    %v262 = vadd.f32 %v210, %v222
    %v263 = vadd.f32 %v211, %v226
    %v264 = vadd.f32 %v212, %v230
    %v265 = vadd.f32 %v213, %v234
    %v266 = vadd.f32 %v214, %v222
    %v267 = vadd.f32 %v215, %v226
    %v268 = vadd.f32 %v216, %v230
    %v269 = vadd.f32 %v217, %v234
    %v270 = vxor.u32 %v239, 2147483648
    %v271 = vmul.f32 %v270, 1.442695
    %v272 = vpow.pop %v271
    %v273 = vadd.f32 %v272, 1.0
    %v274 = vrcp.pop %v273
    %v275 = vmul.f32 1.0, %v274
    %v276 = vtanh.pop %v240
    %v277 = vxor.u32 %v241, 2147483648
    %v278 = vmul.f32 %v277, 1.442695
    %v279 = vpow.pop %v278
    %v280 = vadd.f32 %v279, 1.0
    %v281 = vrcp.pop %v280
    %v282 = vmul.f32 1.0, %v281
    %v283 = vmul.f32 %v275, %v276
    %v284 = vtanh.pop %v283
    %v285 = vmul.f32 %v282, %v284
    %286 = vmatprep.subr.mxu0 %v47
    %287 = vmatpush1.msra.mxu0 %v46
    %288 = vmatprep.subr.mxu0 %v51
    %289 = vmatpush1.msra.mxu0 %v50
    %290 = vmatprep.subr.mxu0 %v55
    %291 = vmatpush1.msra.mxu0 %v54
    %292 = vmatprep.subr.mxu0 %v59
    %293 = vmatpush1.msra.mxu0 %v58
    %294 = vmatprep.subr.mxu0 %v63
    %295 = vmatpush1.msra.mxu0 %v62
    %296 = vmatprep.subr.mxu0 %v67
    %297 = vmatpush1.msra.mxu0 %v66
    %298 = vmatprep.subr.mxu0 %v71
    %299 = vmatpush1.msra.mxu0 %v70
    %300 = vmatprep.subr.mxu0 %v75
    %301 = vmatpush1.msra.mxu0 %v74
    %302 = vmatprep.subr.mxu0 %v79
    %303 = vmatpush1.msra.mxu0 %v78
    %304 = vmatprep.subr.mxu0 %v83
    %305 = vmatpush1.msra.mxu0 %v82
    %306 = vmatprep.subr.mxu0 %v87
    %307 = vmatpush1.msra.mxu0 %v86
    %308 = vmatprep.subr.mxu0 %v91
    %309 = vmatpush1.msra.mxu0 %v90
    %310 = vmatprep.subr.mxu0 %v95
    %311 = vmatpush1.msra.mxu0 %v94
    %312 = vmatprep.subr.mxu0 %v99
    %313 = vmatpush1.msra.mxu0 %v98
    %314 = vmatprep.subr.mxu0 %v103
    %315 = vmatpush1.msra.mxu0 %v102
    %316 = vmatprep.subr.mxu0 %v107
    %317 = vmatpush1.msra.mxu0 %v106
    %318 = vmatprep.subr.mxu0 0.0
    %319 = vmatpush1.msra.mxu0 0.0
    %320 = vmatprep.subr.mxu0 0.0
    %321 = vmatpush1.msra.mxu0 0.0
    %322 = vmatprep.subr.mxu0 0.0
    %323 = vmatpush1.msra.mxu0 0.0
    %324 = vmatprep.subr.mxu0 0.0
    %325 = vmatpush1.msra.mxu0 0.0
    %326 = vmatprep.subr.mxu0 0.0
    %327 = vmatpush1.msra.mxu0 0.0
    %328 = vmatprep.subr.mxu0 0.0
    %329 = vmatpush1.msra.mxu0 0.0
    %330 = vmatprep.subr.mxu0 0.0
    %331 = vmatpush1.msra.mxu0 0.0
    %332 = vmatprep.subr.mxu0 0.0
    %333 = vmatpush1.msra.mxu0 0.0
    %334 = vmatprep.subr.mxu0 0.0
    %335 = vmatpush1.msra.mxu0 0.0
    %336 = vmatprep.subr.mxu0 0.0
    %337 = vmatpush1.msra.mxu0 0.0
    %338 = vmatprep.subr.mxu0 0.0
    %339 = vmatpush1.msra.mxu0 0.0
    %340 = vmatprep.subr.mxu0 0.0
    %341 = vmatpush1.msra.mxu0 0.0
    %342 = vmatprep.subr.mxu0 0.0
    %343 = vmatpush1.msra.mxu0 0.0
    %344 = vmatprep.subr.mxu0 0.0
    %345 = vmatpush1.msra.mxu0 0.0
    %346 = vmatprep.subr.mxu0 0.0
    %347 = vmatpush1.msra.mxu0 0.0
    %348 = vmatprep.subr.mxu0 0.0
    %349 = vmatpush1.msra.mxu0 0.0
    %350 = vmatprep.mubr.f32.mxu0 0.0
    %351 = vmatmul.mubr.f32.gmra.mrb[0].mxu0 %v285
    %v352 = vpop.f32.mrb[0].mxu0
    %v353 = vadd.f32 0.0, %v352
    %v354 = vpop.f32.mrb[0].mxu0
    %v355 = vadd.f32 0.0, %v354
    %356 = vdwg.mxu0
    %357 = vmatprep.subr.mxu0 %v49
    %358 = vmatpush1.msra.mxu0 %v48
    %359 = vmatprep.subr.mxu0 %v53
    %360 = vmatpush1.msra.mxu0 %v52
    %361 = vmatprep.subr.mxu0 %v57
    %362 = vmatpush1.msra.mxu0 %v56
    %363 = vmatprep.subr.mxu0 %v61
    %364 = vmatpush1.msra.mxu0 %v60
    %365 = vmatprep.subr.mxu0 %v65
    %366 = vmatpush1.msra.mxu0 %v64
    %367 = vmatprep.subr.mxu0 %v69
    %368 = vmatpush1.msra.mxu0 %v68
    %369 = vmatprep.subr.mxu0 %v73
    %370 = vmatpush1.msra.mxu0 %v72
    %371 = vmatprep.subr.mxu0 %v77
    %372 = vmatpush1.msra.mxu0 %v76
    %373 = vmatprep.subr.mxu0 %v81
    %374 = vmatpush1.msra.mxu0 %v80
    %375 = vmatprep.subr.mxu0 %v85
    %376 = vmatpush1.msra.mxu0 %v84
    %377 = vmatprep.subr.mxu0 %v89
    %378 = vmatpush1.msra.mxu0 %v88
    %379 = vmatprep.subr.mxu0 %v93
    %380 = vmatpush1.msra.mxu0 %v92
    %381 = vmatprep.subr.mxu0 %v97
    %382 = vmatpush1.msra.mxu0 %v96
    %383 = vmatprep.subr.mxu0 %v101
    %384 = vmatpush1.msra.mxu0 %v100
    %385 = vmatprep.subr.mxu0 %v105
    %386 = vmatpush1.msra.mxu0 %v104
    %387 = vmatprep.subr.mxu0 %v109
    %388 = vmatpush1.msra.mxu0 %v108
    %389 = vmatprep.subr.mxu0 0.0
    %390 = vmatpush1.msra.mxu0 0.0
    %391 = vmatprep.subr.mxu0 0.0
    %392 = vmatpush1.msra.mxu0 0.0
    %393 = vmatprep.subr.mxu0 0.0
    %394 = vmatpush1.msra.mxu0 0.0
    %395 = vmatprep.subr.mxu0 0.0
    %396 = vmatpush1.msra.mxu0 0.0
    %397 = vmatprep.subr.mxu0 0.0
    %398 = vmatpush1.msra.mxu0 0.0
    %399 = vmatprep.subr.mxu0 0.0
    %400 = vmatpush1.msra.mxu0 0.0
    %401 = vmatprep.subr.mxu0 0.0
    %402 = vmatpush1.msra.mxu0 0.0
    %403 = vmatprep.subr.mxu0 0.0
    %404 = vmatpush1.msra.mxu0 0.0
    %405 = vmatprep.subr.mxu0 0.0
    %406 = vmatpush1.msra.mxu0 0.0
    %407 = vmatprep.subr.mxu0 0.0
    %408 = vmatpush1.msra.mxu0 0.0
    %409 = vmatprep.subr.mxu0 0.0
    %410 = vmatpush1.msra.mxu0 0.0
    %411 = vmatprep.subr.mxu0 0.0
    %412 = vmatpush1.msra.mxu0 0.0
    %413 = vmatprep.subr.mxu0 0.0
    %414 = vmatpush1.msra.mxu0 0.0
    %415 = vmatprep.subr.mxu0 0.0
    %416 = vmatpush1.msra.mxu0 0.0
    %417 = vmatprep.subr.mxu0 0.0
    %418 = vmatpush1.msra.mxu0 0.0
    %419 = vmatprep.subr.mxu0 0.0
    %420 = vmatpush1.msra.mxu0 0.0
    %421 = vmatprep.mubr.f32.mxu0 0.0
    %422 = vmatmul.mubr.f32.gmra.mrb[0].mxu0 %v285
    %v423 = vpop.f32.mrb[0].mxu0
    %v424 = vadd.f32 0.0, %v423
    %v425 = vpop.f32.mrb[0].mxu0
    %v426 = vadd.f32 0.0, %v425
    %427 = vdwg.mxu0
    %v428 = vadd.f32 %v242, %v353
    %v429 = vadd.f32 %v243, %v355
    %v430 = vadd.f32 %v244, %v424
    %v431 = vadd.f32 %v245, %v426
    %v432 = vxor.u32 %v428, 2147483648
    %v433 = vmul.f32 %v432, 1.442695
    %v434 = vpow.pop %v433
    %v435 = vadd.f32 %v434, 1.0
    %v436 = vrcp.pop %v435
    %v437 = vmul.f32 1.0, %v436
    %v438 = vtanh.pop %v430
    %v439 = vxor.u32 %v431, 2147483648
    %v440 = vmul.f32 %v439, 1.442695
    %v441 = vpow.pop %v440
    %v442 = vadd.f32 %v441, 1.0
    %v443 = vrcp.pop %v442
    %v444 = vmul.f32 1.0, %v443
    %v445 = vxor.u32 %v429, 2147483648
    %v446 = vmul.f32 %v445, 1.442695
    %v447 = vpow.pop %v446
    %v448 = vadd.f32 %v447, 1.0
    %v449 = vrcp.pop %v448
    %v450 = vmul.f32 1.0, %v449
    %v451 = vmul.f32 %v450, %v283
    %v452 = vmul.f32 %v437, %v438
    %v453 = vadd.f32 %v451, %v452
    %v454 = vtanh.pop %v453
    %v455 = vmul.f32 %v444, %v454
    %456 = vmatprep.subr.mxu0 %v47
    %457 = vmatpush1.msra.mxu0 %v46
    %458 = vmatprep.subr.mxu0 %v51
    %459 = vmatpush1.msra.mxu0 %v50
    %460 = vmatprep.subr.mxu0 %v55
    %461 = vmatpush1.msra.mxu0 %v54
    %462 = vmatprep.subr.mxu0 %v59
    %463 = vmatpush1.msra.mxu0 %v58
    %464 = vmatprep.subr.mxu0 %v63
    %465 = vmatpush1.msra.mxu0 %v62
    %466 = vmatprep.subr.mxu0 %v67
    %467 = vmatpush1.msra.mxu0 %v66
    %468 = vmatprep.subr.mxu0 %v71
    %469 = vmatpush1.msra.mxu0 %v70
    %470 = vmatprep.subr.mxu0 %v75
    %471 = vmatpush1.msra.mxu0 %v74
    %472 = vmatprep.subr.mxu0 %v79
    %473 = vmatpush1.msra.mxu0 %v78
    %474 = vmatprep.subr.mxu0 %v83
    %475 = vmatpush1.msra.mxu0 %v82
    %476 = vmatprep.subr.mxu0 %v87
    %477 = vmatpush1.msra.mxu0 %v86
    %478 = vmatprep.subr.mxu0 %v91
    %479 = vmatpush1.msra.mxu0 %v90
    %480 = vmatprep.subr.mxu0 %v95
    %481 = vmatpush1.msra.mxu0 %v94
    %482 = vmatprep.subr.mxu0 %v99
    %483 = vmatpush1.msra.mxu0 %v98
    %484 = vmatprep.subr.mxu0 %v103
    %485 = vmatpush1.msra.mxu0 %v102
    %486 = vmatprep.subr.mxu0 %v107
    %487 = vmatpush1.msra.mxu0 %v106
    %488 = vmatprep.subr.mxu0 0.0
    %489 = vmatpush1.msra.mxu0 0.0
    %490 = vmatprep.subr.mxu0 0.0
    %491 = vmatpush1.msra.mxu0 0.0
    %492 = vmatprep.subr.mxu0 0.0
    %493 = vmatpush1.msra.mxu0 0.0
    %494 = vmatprep.subr.mxu0 0.0
    %495 = vmatpush1.msra.mxu0 0.0
    %496 = vmatprep.subr.mxu0 0.0
    %497 = vmatpush1.msra.mxu0 0.0
    %498 = vmatprep.subr.mxu0 0.0
    %499 = vmatpush1.msra.mxu0 0.0
    %500 = vmatprep.subr.mxu0 0.0
    %501 = vmatpush1.msra.mxu0 0.0
    %502 = vmatprep.subr.mxu0 0.0
    %503 = vmatpush1.msra.mxu0 0.0
    %504 = vmatprep.subr.mxu0 0.0
    %505 = vmatpush1.msra.mxu0 0.0
    %506 = vmatprep.subr.mxu0 0.0
    %507 = vmatpush1.msra.mxu0 0.0
    %508 = vmatprep.subr.mxu0 0.0
    %509 = vmatpush1.msra.mxu0 0.0
    %510 = vmatprep.subr.mxu0 0.0
    %511 = vmatpush1.msra.mxu0 0.0
    %512 = vmatprep.subr.mxu0 0.0
    %513 = vmatpush1.msra.mxu0 0.0
    %514 = vmatprep.subr.mxu0 0.0
    %515 = vmatpush1.msra.mxu0 0.0
    %516 = vmatprep.subr.mxu0 0.0
    %517 = vmatpush1.msra.mxu0 0.0
    %518 = vmatprep.subr.mxu0 0.0
    %519 = vmatpush1.msra.mxu0 0.0
    %520 = vmatprep.mubr.f32.mxu0 0.0
    %521 = vmatmul.mubr.f32.gmra.mrb[0].mxu0 %v455
    %v522 = vpop.f32.mrb[0].mxu0
    %v523 = vadd.f32 0.0, %v522
    %v524 = vpop.f32.mrb[0].mxu0
    %v525 = vadd.f32 0.0, %v524
    %526 = vdwg.mxu0
    %527 = vmatprep.subr.mxu0 %v49
    %528 = vmatpush1.msra.mxu0 %v48
    %529 = vmatprep.subr.mxu0 %v53
    %530 = vmatpush1.msra.mxu0 %v52
    %531 = vmatprep.subr.mxu0 %v57
    %532 = vmatpush1.msra.mxu0 %v56
    %533 = vmatprep.subr.mxu0 %v61
    %534 = vmatpush1.msra.mxu0 %v60
    %535 = vmatprep.subr.mxu0 %v65
    %536 = vmatpush1.msra.mxu0 %v64
    %537 = vmatprep.subr.mxu0 %v69
    %538 = vmatpush1.msra.mxu0 %v68
    %539 = vmatprep.subr.mxu0 %v73
    %540 = vmatpush1.msra.mxu0 %v72
    %541 = vmatprep.subr.mxu0 %v77
    %542 = vmatpush1.msra.mxu0 %v76
    %543 = vmatprep.subr.mxu0 %v81
    %544 = vmatpush1.msra.mxu0 %v80
    %545 = vmatprep.subr.mxu0 %v85
    %546 = vmatpush1.msra.mxu0 %v84
    %547 = vmatprep.subr.mxu0 %v89
    %548 = vmatpush1.msra.mxu0 %v88
    %549 = vmatprep.subr.mxu0 %v93
    %550 = vmatpush1.msra.mxu0 %v92
    %551 = vmatprep.subr.mxu0 %v97
    %552 = vmatpush1.msra.mxu0 %v96
    %553 = vmatprep.subr.mxu0 %v101
    %554 = vmatpush1.msra.mxu0 %v100
    %555 = vmatprep.subr.mxu0 %v105
    %556 = vmatpush1.msra.mxu0 %v104
    %557 = vmatprep.subr.mxu0 %v109
    %558 = vmatpush1.msra.mxu0 %v108
    %559 = vmatprep.subr.mxu0 0.0
    %560 = vmatpush1.msra.mxu0 0.0
    %561 = vmatprep.subr.mxu0 0.0
    %562 = vmatpush1.msra.mxu0 0.0
    %563 = vmatprep.subr.mxu0 0.0
    %564 = vmatpush1.msra.mxu0 0.0
    %565 = vmatprep.subr.mxu0 0.0
    %566 = vmatpush1.msra.mxu0 0.0
    %567 = vmatprep.subr.mxu0 0.0
    %568 = vmatpush1.msra.mxu0 0.0
    %569 = vmatprep.subr.mxu0 0.0
    %570 = vmatpush1.msra.mxu0 0.0
    %571 = vmatprep.subr.mxu0 0.0
    %572 = vmatpush1.msra.mxu0 0.0
    %573 = vmatprep.subr.mxu0 0.0
    %574 = vmatpush1.msra.mxu0 0.0
    %575 = vmatprep.subr.mxu0 0.0
    %576 = vmatpush1.msra.mxu0 0.0
    %577 = vmatprep.subr.mxu0 0.0
    %578 = vmatpush1.msra.mxu0 0.0
    %579 = vmatprep.subr.mxu0 0.0
    %580 = vmatpush1.msra.mxu0 0.0
    %581 = vmatprep.subr.mxu0 0.0
    %582 = vmatpush1.msra.mxu0 0.0
    %583 = vmatprep.subr.mxu0 0.0
    %584 = vmatpush1.msra.mxu0 0.0
    %585 = vmatprep.subr.mxu0 0.0
    %586 = vmatpush1.msra.mxu0 0.0
    %587 = vmatprep.subr.mxu0 0.0
    %588 = vmatpush1.msra.mxu0 0.0
    %589 = vmatprep.subr.mxu0 0.0
    %590 = vmatpush1.msra.mxu0 0.0
    %591 = vmatprep.mubr.f32.mxu0 0.0
    %592 = vmatmul.mubr.f32.gmra.mrb[0].mxu0 %v455
    %v593 = vpop.f32.mrb[0].mxu0
    %v594 = vadd.f32 0.0, %v593
    %v595 = vpop.f32.mrb[0].mxu0
    %v596 = vadd.f32 0.0, %v595
    %597 = vdwg.mxu0
    %v598 = vadd.f32 %v246, %v523
    %v599 = vadd.f32 %v247, %v525
    %v600 = vadd.f32 %v248, %v594
    %v601 = vadd.f32 %v249, %v596
    %v602 = vxor.u32 %v598, 2147483648
    %v603 = vmul.f32 %v602, 1.442695
    %v604 = vpow.pop %v603
    %v605 = vadd.f32 %v604, 1.0
    %v606 = vrcp.pop %v605
    %v607 = vmul.f32 1.0, %v606
    %v608 = vtanh.pop %v600
    %v609 = vxor.u32 %v601, 2147483648
    %v610 = vmul.f32 %v609, 1.442695
    %v611 = vpow.pop %v610
    %v612 = vadd.f32 %v611, 1.0
    %v613 = vrcp.pop %v612
    %v614 = vmul.f32 1.0, %v613
    %v615 = vxor.u32 %v599, 2147483648
    %v616 = vmul.f32 %v615, 1.442695
    %v617 = vpow.pop %v616
    %v618 = vadd.f32 %v617, 1.0
    %v619 = vrcp.pop %v618
    %v620 = vmul.f32 1.0, %v619
    %v621 = vmul.f32 %v620, %v453
    %v622 = vmul.f32 %v607, %v608
    %v623 = vadd.f32 %v621, %v622
    %v624 = vtanh.pop %v623
    %v625 = vmul.f32 %v614, %v624
    %626 = vmatprep.subr.mxu0 %v47
    %627 = vmatpush1.msra.mxu0 %v46
    %628 = vmatprep.subr.mxu0 %v51
    %629 = vmatpush1.msra.mxu0 %v50
    %630 = vmatprep.subr.mxu0 %v55
    %631 = vmatpush1.msra.mxu0 %v54
    %632 = vmatprep.subr.mxu0 %v59
    %633 = vmatpush1.msra.mxu0 %v58
    %634 = vmatprep.subr.mxu0 %v63
    %635 = vmatpush1.msra.mxu0 %v62
    %636 = vmatprep.subr.mxu0 %v67
    %637 = vmatpush1.msra.mxu0 %v66
    %638 = vmatprep.subr.mxu0 %v71
    %639 = vmatpush1.msra.mxu0 %v70
    %640 = vmatprep.subr.mxu0 %v75
    %641 = vmatpush1.msra.mxu0 %v74
    %642 = vmatprep.subr.mxu0 %v79
    %643 = vmatpush1.msra.mxu0 %v78
    %644 = vmatprep.subr.mxu0 %v83
    %645 = vmatpush1.msra.mxu0 %v82
    %646 = vmatprep.subr.mxu0 %v87
    %647 = vmatpush1.msra.mxu0 %v86
    %648 = vmatprep.subr.mxu0 %v91
    %649 = vmatpush1.msra.mxu0 %v90
    %650 = vmatprep.subr.mxu0 %v95
    %651 = vmatpush1.msra.mxu0 %v94
    %652 = vmatprep.subr.mxu0 %v99
    %653 = vmatpush1.msra.mxu0 %v98
    %654 = vmatprep.subr.mxu0 %v103
    %655 = vmatpush1.msra.mxu0 %v102
    %656 = vmatprep.subr.mxu0 %v107
    %657 = vmatpush1.msra.mxu0 %v106
    %658 = vmatprep.subr.mxu0 0.0
    %659 = vmatpush1.msra.mxu0 0.0
    %660 = vmatprep.subr.mxu0 0.0
    %661 = vmatpush1.msra.mxu0 0.0
    %662 = vmatprep.subr.mxu0 0.0
    %663 = vmatpush1.msra.mxu0 0.0
    %664 = vmatprep.subr.mxu0 0.0
    %665 = vmatpush1.msra.mxu0 0.0
    %666 = vmatprep.subr.mxu0 0.0
    %667 = vmatpush1.msra.mxu0 0.0
    %668 = vmatprep.subr.mxu0 0.0
    %669 = vmatpush1.msra.mxu0 0.0
    %670 = vmatprep.subr.mxu0 0.0
    %671 = vmatpush1.msra.mxu0 0.0
    %672 = vmatprep.subr.mxu0 0.0
    %673 = vmatpush1.msra.mxu0 0.0
    %674 = vmatprep.subr.mxu0 0.0
    %675 = vmatpush1.msra.mxu0 0.0
    %676 = vmatprep.subr.mxu0 0.0
    %677 = vmatpush1.msra.mxu0 0.0
    %678 = vmatprep.subr.mxu0 0.0
    %679 = vmatpush1.msra.mxu0 0.0
    %680 = vmatprep.subr.mxu0 0.0
    %681 = vmatpush1.msra.mxu0 0.0
    %682 = vmatprep.subr.mxu0 0.0
    %683 = vmatpush1.msra.mxu0 0.0
    %684 = vmatprep.subr.mxu0 0.0
    %685 = vmatpush1.msra.mxu0 0.0
    %686 = vmatprep.subr.mxu0 0.0
    %687 = vmatpush1.msra.mxu0 0.0
    %688 = vmatprep.subr.mxu0 0.0
    %689 = vmatpush1.msra.mxu0 0.0
    %690 = vmatprep.mubr.f32.mxu0 0.0
    %691 = vmatmul.mubr.f32.gmra.mrb[0].mxu0 %v625
    %v692 = vpop.f32.mrb[0].mxu0
    %v693 = vadd.f32 0.0, %v692
    %v694 = vpop.f32.mrb[0].mxu0
    %v695 = vadd.f32 0.0, %v694
    %696 = vdwg.mxu0
    %697 = vmatprep.subr.mxu0 %v49
    %698 = vmatpush1.msra.mxu0 %v48
    %699 = vmatprep.subr.mxu0 %v53
    %700 = vmatpush1.msra.mxu0 %v52
    %701 = vmatprep.subr.mxu0 %v57
    %702 = vmatpush1.msra.mxu0 %v56
    %703 = vmatprep.subr.mxu0 %v61
    %704 = vmatpush1.msra.mxu0 %v60
    %705 = vmatprep.subr.mxu0 %v65
    %706 = vmatpush1.msra.mxu0 %v64
    %707 = vmatprep.subr.mxu0 %v69
    %708 = vmatpush1.msra.mxu0 %v68
    %709 = vmatprep.subr.mxu0 %v73
    %710 = vmatpush1.msra.mxu0 %v72
    %711 = vmatprep.subr.mxu0 %v77
    %712 = vmatpush1.msra.mxu0 %v76
    %713 = vmatprep.subr.mxu0 %v81
    %714 = vmatpush1.msra.mxu0 %v80
    %715 = vmatprep.subr.mxu0 %v85
    %716 = vmatpush1.msra.mxu0 %v84
    %717 = vmatprep.subr.mxu0 %v89
    %718 = vmatpush1.msra.mxu0 %v88
    %719 = vmatprep.subr.mxu0 %v93
    %720 = vmatpush1.msra.mxu0 %v92
    %721 = vmatprep.subr.mxu0 %v97
    %722 = vmatpush1.msra.mxu0 %v96
    %723 = vmatprep.subr.mxu0 %v101
    %724 = vmatpush1.msra.mxu0 %v100
    %725 = vmatprep.subr.mxu0 %v105
    %726 = vmatpush1.msra.mxu0 %v104
    %727 = vmatprep.subr.mxu0 %v109
    %728 = vmatpush1.msra.mxu0 %v108
    %729 = vmatprep.subr.mxu0 0.0
    %730 = vmatpush1.msra.mxu0 0.0
    %731 = vmatprep.subr.mxu0 0.0
    %732 = vmatpush1.msra.mxu0 0.0
    %733 = vmatprep.subr.mxu0 0.0
    %734 = vmatpush1.msra.mxu0 0.0
    %735 = vmatprep.subr.mxu0 0.0
    %736 = vmatpush1.msra.mxu0 0.0
    %737 = vmatprep.subr.mxu0 0.0
    %738 = vmatpush1.msra.mxu0 0.0
    %739 = vmatprep.subr.mxu0 0.0
    %740 = vmatpush1.msra.mxu0 0.0
    %741 = vmatprep.subr.mxu0 0.0
    %742 = vmatpush1.msra.mxu0 0.0
    %743 = vmatprep.subr.mxu0 0.0
    %744 = vmatpush1.msra.mxu0 0.0
    %745 = vmatprep.subr.mxu0 0.0
    %746 = vmatpush1.msra.mxu0 0.0
    %747 = vmatprep.subr.mxu0 0.0
    %748 = vmatpush1.msra.mxu0 0.0
    %749 = vmatprep.subr.mxu0 0.0
    %750 = vmatpush1.msra.mxu0 0.0
    %751 = vmatprep.subr.mxu0 0.0
    %752 = vmatpush1.msra.mxu0 0.0
    %753 = vmatprep.subr.mxu0 0.0
    %754 = vmatpush1.msra.mxu0 0.0
    %755 = vmatprep.subr.mxu0 0.0
    %756 = vmatpush1.msra.mxu0 0.0
    %757 = vmatprep.subr.mxu0 0.0
    %758 = vmatpush1.msra.mxu0 0.0
    %759 = vmatprep.subr.mxu0 0.0
    %760 = vmatpush1.msra.mxu0 0.0
    %761 = vmatprep.mubr.f32.mxu0 0.0
    %762 = vmatmul.mubr.f32.gmra.mrb[0].mxu0 %v625
    %v763 = vpop.f32.mrb[0].mxu0
    %v764 = vadd.f32 0.0, %v763
    %v765 = vpop.f32.mrb[0].mxu0
    %v766 = vadd.f32 0.0, %v765
    %767 = vdwg.mxu0
    %v768 = vadd.f32 %v250, %v693
    %v769 = vadd.f32 %v251, %v695
    %v770 = vadd.f32 %v252, %v764
    %v771 = vadd.f32 %v253, %v766
    %v772 = vxor.u32 %v768, 2147483648
    %v773 = vmul.f32 %v772, 1.442695
    %v774 = vpow.pop %v773
    %v775 = vadd.f32 %v774, 1.0
    %v776 = vrcp.pop %v775
    %v777 = vmul.f32 1.0, %v776
    %v778 = vtanh.pop %v770
    %v779 = vxor.u32 %v771, 2147483648
    %v780 = vmul.f32 %v779, 1.442695
    %v781 = vpow.pop %v780
    %v782 = vadd.f32 %v781, 1.0
    %v783 = vrcp.pop %v782
    %v784 = vmul.f32 1.0, %v783
    %v785 = vxor.u32 %v769, 2147483648
    %v786 = vmul.f32 %v785, 1.442695
    %v787 = vpow.pop %v786
    %v788 = vadd.f32 %v787, 1.0
    %v789 = vrcp.pop %v788
    %v790 = vmul.f32 1.0, %v789
    %v791 = vmul.f32 %v790, %v623
    %v792 = vmul.f32 %v777, %v778
    %v793 = vadd.f32 %v791, %v792
    %v794 = vtanh.pop %v793
    %v795 = vmul.f32 %v784, %v794
    %796 = vmatprep.subr.mxu0 %v47
    %797 = vmatpush1.msra.mxu0 %v46
    %798 = vmatprep.subr.mxu0 %v51
    %799 = vmatpush1.msra.mxu0 %v50
    %800 = vmatprep.subr.mxu0 %v55
    %801 = vmatpush1.msra.mxu0 %v54
    %802 = vmatprep.subr.mxu0 %v59
    %803 = vmatpush1.msra.mxu0 %v58
    %804 = vmatprep.subr.mxu0 %v63
    %805 = vmatpush1.msra.mxu0 %v62
    %806 = vmatprep.subr.mxu0 %v67
    %807 = vmatpush1.msra.mxu0 %v66
    %808 = vmatprep.subr.mxu0 %v71
    %809 = vmatpush1.msra.mxu0 %v70
    %810 = vmatprep.subr.mxu0 %v75
    %811 = vmatpush1.msra.mxu0 %v74
    %812 = vmatprep.subr.mxu0 %v79
    %813 = vmatpush1.msra.mxu0 %v78
    %814 = vmatprep.subr.mxu0 %v83
    %815 = vmatpush1.msra.mxu0 %v82
    %816 = vmatprep.subr.mxu0 %v87
    %817 = vmatpush1.msra.mxu0 %v86
    %818 = vmatprep.subr.mxu0 %v91
    %819 = vmatpush1.msra.mxu0 %v90
    %820 = vmatprep.subr.mxu0 %v95
    %821 = vmatpush1.msra.mxu0 %v94
    %822 = vmatprep.subr.mxu0 %v99
    %823 = vmatpush1.msra.mxu0 %v98
    %824 = vmatprep.subr.mxu0 %v103
    %825 = vmatpush1.msra.mxu0 %v102
    %826 = vmatprep.subr.mxu0 %v107
    %827 = vmatpush1.msra.mxu0 %v106
    %828 = vmatprep.subr.mxu0 0.0
    %829 = vmatpush1.msra.mxu0 0.0
    %830 = vmatprep.subr.mxu0 0.0
    %831 = vmatpush1.msra.mxu0 0.0
    %832 = vmatprep.subr.mxu0 0.0
    %833 = vmatpush1.msra.mxu0 0.0
    %834 = vmatprep.subr.mxu0 0.0
    %835 = vmatpush1.msra.mxu0 0.0
    %836 = vmatprep.subr.mxu0 0.0
    %837 = vmatpush1.msra.mxu0 0.0
    %838 = vmatprep.subr.mxu0 0.0
    %839 = vmatpush1.msra.mxu0 0.0
    %840 = vmatprep.subr.mxu0 0.0
    %841 = vmatpush1.msra.mxu0 0.0
    %842 = vmatprep.subr.mxu0 0.0
    %843 = vmatpush1.msra.mxu0 0.0
    %844 = vmatprep.subr.mxu0 0.0
    %845 = vmatpush1.msra.mxu0 0.0
    %846 = vmatprep.subr.mxu0 0.0
    %847 = vmatpush1.msra.mxu0 0.0
    %848 = vmatprep.subr.mxu0 0.0
    %849 = vmatpush1.msra.mxu0 0.0
    %850 = vmatprep.subr.mxu0 0.0
    %851 = vmatpush1.msra.mxu0 0.0
    %852 = vmatprep.subr.mxu0 0.0
    %853 = vmatpush1.msra.mxu0 0.0
    %854 = vmatprep.subr.mxu0 0.0
    %855 = vmatpush1.msra.mxu0 0.0
    %856 = vmatprep.subr.mxu0 0.0
    %857 = vmatpush1.msra.mxu0 0.0
    %858 = vmatprep.subr.mxu0 0.0
    %859 = vmatpush1.msra.mxu0 0.0
    %860 = vmatprep.mubr.f32.mxu0 0.0
    %861 = vmatmul.mubr.f32.gmra.mrb[0].mxu0 %v795
    %v862 = vpop.f32.mrb[0].mxu0
    %v863 = vadd.f32 0.0, %v862
    %v864 = vpop.f32.mrb[0].mxu0
    %v865 = vadd.f32 0.0, %v864
    %866 = vdwg.mxu0
    %867 = vmatprep.subr.mxu0 %v49
    %868 = vmatpush1.msra.mxu0 %v48
    %869 = vmatprep.subr.mxu0 %v53
    %870 = vmatpush1.msra.mxu0 %v52
    %871 = vmatprep.subr.mxu0 %v57
    %872 = vmatpush1.msra.mxu0 %v56
    %873 = vmatprep.subr.mxu0 %v61
    %874 = vmatpush1.msra.mxu0 %v60
    %875 = vmatprep.subr.mxu0 %v65
    %876 = vmatpush1.msra.mxu0 %v64
    %877 = vmatprep.subr.mxu0 %v69
    %878 = vmatpush1.msra.mxu0 %v68
    %879 = vmatprep.subr.mxu0 %v73
    %880 = vmatpush1.msra.mxu0 %v72
    %881 = vmatprep.subr.mxu0 %v77
    %882 = vmatpush1.msra.mxu0 %v76
    %883 = vmatprep.subr.mxu0 %v81
    %884 = vmatpush1.msra.mxu0 %v80
    %885 = vmatprep.subr.mxu0 %v85
    %886 = vmatpush1.msra.mxu0 %v84
    %887 = vmatprep.subr.mxu0 %v89
    %888 = vmatpush1.msra.mxu0 %v88
    %889 = vmatprep.subr.mxu0 %v93
    %890 = vmatpush1.msra.mxu0 %v92
    %891 = vmatprep.subr.mxu0 %v97
    %892 = vmatpush1.msra.mxu0 %v96
    %893 = vmatprep.subr.mxu0 %v101
    %894 = vmatpush1.msra.mxu0 %v100
    %895 = vmatprep.subr.mxu0 %v105
    %896 = vmatpush1.msra.mxu0 %v104
    %897 = vmatprep.subr.mxu0 %v109
    %898 = vmatpush1.msra.mxu0 %v108
    %899 = vmatprep.subr.mxu0 0.0
    %900 = vmatpush1.msra.mxu0 0.0
    %901 = vmatprep.subr.mxu0 0.0
    %902 = vmatpush1.msra.mxu0 0.0
    %903 = vmatprep.subr.mxu0 0.0
    %904 = vmatpush1.msra.mxu0 0.0
    %905 = vmatprep.subr.mxu0 0.0
    %906 = vmatpush1.msra.mxu0 0.0
    %907 = vmatprep.subr.mxu0 0.0
    %908 = vmatpush1.msra.mxu0 0.0
    %909 = vmatprep.subr.mxu0 0.0
    %910 = vmatpush1.msra.mxu0 0.0
    %911 = vmatprep.subr.mxu0 0.0
    %912 = vmatpush1.msra.mxu0 0.0
    %913 = vmatprep.subr.mxu0 0.0
    %914 = vmatpush1.msra.mxu0 0.0
    %915 = vmatprep.subr.mxu0 0.0
    %916 = vmatpush1.msra.mxu0 0.0
    %917 = vmatprep.subr.mxu0 0.0
    %918 = vmatpush1.msra.mxu0 0.0
    %919 = vmatprep.subr.mxu0 0.0
    %920 = vmatpush1.msra.mxu0 0.0
    %921 = vmatprep.subr.mxu0 0.0
    %922 = vmatpush1.msra.mxu0 0.0
    %923 = vmatprep.subr.mxu0 0.0
    %924 = vmatpush1.msra.mxu0 0.0
    %925 = vmatprep.subr.mxu0 0.0
    %926 = vmatpush1.msra.mxu0 0.0
    %927 = vmatprep.subr.mxu0 0.0
    %928 = vmatpush1.msra.mxu0 0.0
    %929 = vmatprep.subr.mxu0 0.0
    %930 = vmatpush1.msra.mxu0 0.0
    %931 = vmatprep.mubr.f32.mxu0 0.0
    %932 = vmatmul.mubr.f32.gmra.mrb[0].mxu0 %v795
    %v933 = vpop.f32.mrb[0].mxu0
    %v934 = vadd.f32 0.0, %v933
    %v935 = vpop.f32.mrb[0].mxu0
    %v936 = vadd.f32 0.0, %v935
    %937 = vdwg.mxu0
    %v938 = vadd.f32 %v254, %v863
    %v939 = vadd.f32 %v255, %v865
    %v940 = vadd.f32 %v256, %v934
    %v941 = vadd.f32 %v257, %v936
    %v942 = vxor.u32 %v938, 2147483648
    %v943 = vmul.f32 %v942, 1.442695
    %v944 = vpow.pop %v943
    %v945 = vadd.f32 %v944, 1.0
    %v946 = vrcp.pop %v945
    %v947 = vmul.f32 1.0, %v946
    %v948 = vtanh.pop %v940
    %v949 = vxor.u32 %v941, 2147483648
    %v950 = vmul.f32 %v949, 1.442695
    %v951 = vpow.pop %v950
    %v952 = vadd.f32 %v951, 1.0
    %v953 = vrcp.pop %v952
    %v954 = vmul.f32 1.0, %v953
    %v955 = vxor.u32 %v939, 2147483648
    %v956 = vmul.f32 %v955, 1.442695
    %v957 = vpow.pop %v956
    %v958 = vadd.f32 %v957, 1.0
    %v959 = vrcp.pop %v958
    %v960 = vmul.f32 1.0, %v959
    %v961 = vmul.f32 %v960, %v793
    %v962 = vmul.f32 %v947, %v948
    %v963 = vadd.f32 %v961, %v962
    %v964 = vtanh.pop %v963
    %v965 = vmul.f32 %v954, %v964
    %966 = vmatprep.subr.mxu0 %v47
    %967 = vmatpush1.msra.mxu0 %v46
    %968 = vmatprep.subr.mxu0 %v51
    %969 = vmatpush1.msra.mxu0 %v50
    %970 = vmatprep.subr.mxu0 %v55
    %971 = vmatpush1.msra.mxu0 %v54
    %972 = vmatprep.subr.mxu0 %v59
    %973 = vmatpush1.msra.mxu0 %v58
    %974 = vmatprep.subr.mxu0 %v63
    %975 = vmatpush1.msra.mxu0 %v62
    %976 = vmatprep.subr.mxu0 %v67
    %977 = vmatpush1.msra.mxu0 %v66
    %978 = vmatprep.subr.mxu0 %v71
    %979 = vmatpush1.msra.mxu0 %v70
    %980 = vmatprep.subr.mxu0 %v75
    %981 = vmatpush1.msra.mxu0 %v74
    %982 = vmatprep.subr.mxu0 %v79
    %983 = vmatpush1.msra.mxu0 %v78
    %984 = vmatprep.subr.mxu0 %v83
    %985 = vmatpush1.msra.mxu0 %v82
    %986 = vmatprep.subr.mxu0 %v87
    %987 = vmatpush1.msra.mxu0 %v86
    %988 = vmatprep.subr.mxu0 %v91
    %989 = vmatpush1.msra.mxu0 %v90
    %990 = vmatprep.subr.mxu0 %v95
    %991 = vmatpush1.msra.mxu0 %v94
    %992 = vmatprep.subr.mxu0 %v99
    %993 = vmatpush1.msra.mxu0 %v98
    %994 = vmatprep.subr.mxu0 %v103
    %995 = vmatpush1.msra.mxu0 %v102
    %996 = vmatprep.subr.mxu0 %v107
    %997 = vmatpush1.msra.mxu0 %v106
    %998 = vmatprep.subr.mxu0 0.0
    %999 = vmatpush1.msra.mxu0 0.0
    %1000 = vmatprep.subr.mxu0 0.0
    %1001 = vmatpush1.msra.mxu0 0.0
    %1002 = vmatprep.subr.mxu0 0.0
    %1003 = vmatpush1.msra.mxu0 0.0
    %1004 = vmatprep.subr.mxu0 0.0
    %1005 = vmatpush1.msra.mxu0 0.0
    %1006 = vmatprep.subr.mxu0 0.0
    %1007 = vmatpush1.msra.mxu0 0.0
    %1008 = vmatprep.subr.mxu0 0.0
    %1009 = vmatpush1.msra.mxu0 0.0
    %1010 = vmatprep.subr.mxu0 0.0
    %1011 = vmatpush1.msra.mxu0 0.0
    %1012 = vmatprep.subr.mxu0 0.0
    %1013 = vmatpush1.msra.mxu0 0.0
    %1014 = vmatprep.subr.mxu0 0.0
    %1015 = vmatpush1.msra.mxu0 0.0
    %1016 = vmatprep.subr.mxu0 0.0
    %1017 = vmatpush1.msra.mxu0 0.0
    %1018 = vmatprep.subr.mxu0 0.0
    %1019 = vmatpush1.msra.mxu0 0.0
    %1020 = vmatprep.subr.mxu0 0.0
    %1021 = vmatpush1.msra.mxu0 0.0
    %1022 = vmatprep.subr.mxu0 0.0
    %1023 = vmatpush1.msra.mxu0 0.0
    %1024 = vmatprep.subr.mxu0 0.0
    %1025 = vmatpush1.msra.mxu0 0.0
    %1026 = vmatprep.subr.mxu0 0.0
    %1027 = vmatpush1.msra.mxu0 0.0
    %1028 = vmatprep.subr.mxu0 0.0
    %1029 = vmatpush1.msra.mxu0 0.0
    %1030 = vmatprep.mubr.f32.mxu0 0.0
    %1031 = vmatmul.mubr.f32.gmra.mrb[0].mxu0 %v965
    %v1032 = vpop.f32.mrb[0].mxu0
    %v1033 = vadd.f32 0.0, %v1032
    %v1034 = vpop.f32.mrb[0].mxu0
    %v1035 = vadd.f32 0.0, %v1034
    %1036 = vdwg.mxu0
    %1037 = vmatprep.subr.mxu0 %v49
    %1038 = vmatpush1.msra.mxu0 %v48
    %1039 = vmatprep.subr.mxu0 %v53
    %1040 = vmatpush1.msra.mxu0 %v52
    %1041 = vmatprep.subr.mxu0 %v57
    %1042 = vmatpush1.msra.mxu0 %v56
    %1043 = vmatprep.subr.mxu0 %v61
    %1044 = vmatpush1.msra.mxu0 %v60
    %1045 = vmatprep.subr.mxu0 %v65
    %1046 = vmatpush1.msra.mxu0 %v64
    %1047 = vmatprep.subr.mxu0 %v69
    %1048 = vmatpush1.msra.mxu0 %v68
    %1049 = vmatprep.subr.mxu0 %v73
    %1050 = vmatpush1.msra.mxu0 %v72
    %1051 = vmatprep.subr.mxu0 %v77
    %1052 = vmatpush1.msra.mxu0 %v76
    %1053 = vmatprep.subr.mxu0 %v81
    %1054 = vmatpush1.msra.mxu0 %v80
    %1055 = vmatprep.subr.mxu0 %v85
    %1056 = vmatpush1.msra.mxu0 %v84
    %1057 = vmatprep.subr.mxu0 %v89
    %1058 = vmatpush1.msra.mxu0 %v88
    %1059 = vmatprep.subr.mxu0 %v93
    %1060 = vmatpush1.msra.mxu0 %v92
    %1061 = vmatprep.subr.mxu0 %v97
    %1062 = vmatpush1.msra.mxu0 %v96
    %1063 = vmatprep.subr.mxu0 %v101
    %1064 = vmatpush1.msra.mxu0 %v100
    %1065 = vmatprep.subr.mxu0 %v105
    %1066 = vmatpush1.msra.mxu0 %v104
    %1067 = vmatprep.subr.mxu0 %v109
    %1068 = vmatpush1.msra.mxu0 %v108
    %1069 = vmatprep.subr.mxu0 0.0
    %1070 = vmatpush1.msra.mxu0 0.0
    %1071 = vmatprep.subr.mxu0 0.0
    %1072 = vmatpush1.msra.mxu0 0.0
    %1073 = vmatprep.subr.mxu0 0.0
    %1074 = vmatpush1.msra.mxu0 0.0
    %1075 = vmatprep.subr.mxu0 0.0
    %1076 = vmatpush1.msra.mxu0 0.0
    %1077 = vmatprep.subr.mxu0 0.0
    %1078 = vmatpush1.msra.mxu0 0.0
    %1079 = vmatprep.subr.mxu0 0.0
    %1080 = vmatpush1.msra.mxu0 0.0
    %1081 = vmatprep.subr.mxu0 0.0
    %1082 = vmatpush1.msra.mxu0 0.0
    %1083 = vmatprep.subr.mxu0 0.0
    %1084 = vmatpush1.msra.mxu0 0.0
    %1085 = vmatprep.subr.mxu0 0.0
    %1086 = vmatpush1.msra.mxu0 0.0
    %1087 = vmatprep.subr.mxu0 0.0
    %1088 = vmatpush1.msra.mxu0 0.0
    %1089 = vmatprep.subr.mxu0 0.0
    %1090 = vmatpush1.msra.mxu0 0.0
    %1091 = vmatprep.subr.mxu0 0.0
    %1092 = vmatpush1.msra.mxu0 0.0
    %1093 = vmatprep.subr.mxu0 0.0
    %1094 = vmatpush1.msra.mxu0 0.0
    %1095 = vmatprep.subr.mxu0 0.0
    %1096 = vmatpush1.msra.mxu0 0.0
    %1097 = vmatprep.subr.mxu0 0.0
    %1098 = vmatpush1.msra.mxu0 0.0
    %1099 = vmatprep.subr.mxu0 0.0
    %1100 = vmatpush1.msra.mxu0 0.0
    %1101 = vmatprep.mubr.f32.mxu0 0.0
    %1102 = vmatmul.mubr.f32.gmra.mrb[0].mxu0 %v965
    %v1103 = vpop.f32.mrb[0].mxu0
    %v1104 = vadd.f32 0.0, %v1103
    %v1105 = vpop.f32.mrb[0].mxu0
    %v1106 = vadd.f32 0.0, %v1105
    %1107 = vdwg.mxu0
    %v1108 = vadd.f32 %v258, %v1033
    %v1109 = vadd.f32 %v259, %v1035
    %v1110 = vadd.f32 %v260, %v1104
    %v1111 = vadd.f32 %v261, %v1106
    %v1112 = vxor.u32 %v1108, 2147483648
    %v1113 = vmul.f32 %v1112, 1.442695
    %v1114 = vpow.pop %v1113
    %v1115 = vadd.f32 %v1114, 1.0
    %v1116 = vrcp.pop %v1115
    %v1117 = vmul.f32 1.0, %v1116
    %v1118 = vtanh.pop %v1110
    %v1119 = vxor.u32 %v1111, 2147483648
    %v1120 = vmul.f32 %v1119, 1.442695
    %v1121 = vpow.pop %v1120
    %v1122 = vadd.f32 %v1121, 1.0
    %v1123 = vrcp.pop %v1122
    %v1124 = vmul.f32 1.0, %v1123
    %v1125 = vxor.u32 %v1109, 2147483648
    %v1126 = vmul.f32 %v1125, 1.442695
    %v1127 = vpow.pop %v1126
    %v1128 = vadd.f32 %v1127, 1.0
    %v1129 = vrcp.pop %v1128
    %v1130 = vmul.f32 1.0, %v1129
    %v1131 = vmul.f32 %v1130, %v963
    %v1132 = vmul.f32 %v1117, %v1118
    %v1133 = vadd.f32 %v1131, %v1132
    %v1134 = vtanh.pop %v1133
    %v1135 = vmul.f32 %v1124, %v1134
    %1136 = vmatprep.subr.mxu0 %v47
    %1137 = vmatpush1.msra.mxu0 %v46
    %1138 = vmatprep.subr.mxu0 %v51
    %1139 = vmatpush1.msra.mxu0 %v50
    %1140 = vmatprep.subr.mxu0 %v55
    %1141 = vmatpush1.msra.mxu0 %v54
    %1142 = vmatprep.subr.mxu0 %v59
    %1143 = vmatpush1.msra.mxu0 %v58
    %1144 = vmatprep.subr.mxu0 %v63
    %1145 = vmatpush1.msra.mxu0 %v62
    %1146 = vmatprep.subr.mxu0 %v67
    %1147 = vmatpush1.msra.mxu0 %v66
    %1148 = vmatprep.subr.mxu0 %v71
    %1149 = vmatpush1.msra.mxu0 %v70
    %1150 = vmatprep.subr.mxu0 %v75
    %1151 = vmatpush1.msra.mxu0 %v74
    %1152 = vmatprep.subr.mxu0 %v79
    %1153 = vmatpush1.msra.mxu0 %v78
    %1154 = vmatprep.subr.mxu0 %v83
    %1155 = vmatpush1.msra.mxu0 %v82
    %1156 = vmatprep.subr.mxu0 %v87
    %1157 = vmatpush1.msra.mxu0 %v86
    %1158 = vmatprep.subr.mxu0 %v91
    %1159 = vmatpush1.msra.mxu0 %v90
    %1160 = vmatprep.subr.mxu0 %v95
    %1161 = vmatpush1.msra.mxu0 %v94
    %1162 = vmatprep.subr.mxu0 %v99
    %1163 = vmatpush1.msra.mxu0 %v98
    %1164 = vmatprep.subr.mxu0 %v103
    %1165 = vmatpush1.msra.mxu0 %v102
    %1166 = vmatprep.subr.mxu0 %v107
    %1167 = vmatpush1.msra.mxu0 %v106
    %1168 = vmatprep.subr.mxu0 0.0
    %1169 = vmatpush1.msra.mxu0 0.0
    %1170 = vmatprep.subr.mxu0 0.0
    %1171 = vmatpush1.msra.mxu0 0.0
    %1172 = vmatprep.subr.mxu0 0.0
    %1173 = vmatpush1.msra.mxu0 0.0
    %1174 = vmatprep.subr.mxu0 0.0
    %1175 = vmatpush1.msra.mxu0 0.0
    %1176 = vmatprep.subr.mxu0 0.0
    %1177 = vmatpush1.msra.mxu0 0.0
    %1178 = vmatprep.subr.mxu0 0.0
    %1179 = vmatpush1.msra.mxu0 0.0
    %1180 = vmatprep.subr.mxu0 0.0
    %1181 = vmatpush1.msra.mxu0 0.0
    %1182 = vmatprep.subr.mxu0 0.0
    %1183 = vmatpush1.msra.mxu0 0.0
    %1184 = vmatprep.subr.mxu0 0.0
    %1185 = vmatpush1.msra.mxu0 0.0
    %1186 = vmatprep.subr.mxu0 0.0
    %1187 = vmatpush1.msra.mxu0 0.0
    %1188 = vmatprep.subr.mxu0 0.0
    %1189 = vmatpush1.msra.mxu0 0.0
    %1190 = vmatprep.subr.mxu0 0.0
    %1191 = vmatpush1.msra.mxu0 0.0
    %1192 = vmatprep.subr.mxu0 0.0
    %1193 = vmatpush1.msra.mxu0 0.0
    %1194 = vmatprep.subr.mxu0 0.0
    %1195 = vmatpush1.msra.mxu0 0.0
    %1196 = vmatprep.subr.mxu0 0.0
    %1197 = vmatpush1.msra.mxu0 0.0
    %1198 = vmatprep.subr.mxu0 0.0
    %1199 = vmatpush1.msra.mxu0 0.0
    %1200 = vmatprep.mubr.f32.mxu0 0.0
    %1201 = vmatmul.mubr.f32.gmra.mrb[0].mxu0 %v1135
    %v1202 = vpop.f32.mrb[0].mxu0
    %v1203 = vadd.f32 0.0, %v1202
    %v1204 = vpop.f32.mrb[0].mxu0
    %v1205 = vadd.f32 0.0, %v1204
    %1206 = vdwg.mxu0
    %1207 = vmatprep.subr.mxu0 %v49
    %1208 = vmatpush1.msra.mxu0 %v48
    %1209 = vmatprep.subr.mxu0 %v53
    %1210 = vmatpush1.msra.mxu0 %v52
    %1211 = vmatprep.subr.mxu0 %v57
    %1212 = vmatpush1.msra.mxu0 %v56
    %1213 = vmatprep.subr.mxu0 %v61
    %1214 = vmatpush1.msra.mxu0 %v60
    %1215 = vmatprep.subr.mxu0 %v65
    %1216 = vmatpush1.msra.mxu0 %v64
    %1217 = vmatprep.subr.mxu0 %v69
    %1218 = vmatpush1.msra.mxu0 %v68
    %1219 = vmatprep.subr.mxu0 %v73
    %1220 = vmatpush1.msra.mxu0 %v72
    %1221 = vmatprep.subr.mxu0 %v77
    %1222 = vmatpush1.msra.mxu0 %v76
    %1223 = vmatprep.subr.mxu0 %v81
    %1224 = vmatpush1.msra.mxu0 %v80
    %1225 = vmatprep.subr.mxu0 %v85
    %1226 = vmatpush1.msra.mxu0 %v84
    %1227 = vmatprep.subr.mxu0 %v89
    %1228 = vmatpush1.msra.mxu0 %v88
    %1229 = vmatprep.subr.mxu0 %v93
    %1230 = vmatpush1.msra.mxu0 %v92
    %1231 = vmatprep.subr.mxu0 %v97
    %1232 = vmatpush1.msra.mxu0 %v96
    %1233 = vmatprep.subr.mxu0 %v101
    %1234 = vmatpush1.msra.mxu0 %v100
    %1235 = vmatprep.subr.mxu0 %v105
    %1236 = vmatpush1.msra.mxu0 %v104
    %1237 = vmatprep.subr.mxu0 %v109
    %1238 = vmatpush1.msra.mxu0 %v108
    %1239 = vmatprep.subr.mxu0 0.0
    %1240 = vmatpush1.msra.mxu0 0.0
    %1241 = vmatprep.subr.mxu0 0.0
    %1242 = vmatpush1.msra.mxu0 0.0
    %1243 = vmatprep.subr.mxu0 0.0
    %1244 = vmatpush1.msra.mxu0 0.0
    %1245 = vmatprep.subr.mxu0 0.0
    %1246 = vmatpush1.msra.mxu0 0.0
    %1247 = vmatprep.subr.mxu0 0.0
    %1248 = vmatpush1.msra.mxu0 0.0
    %1249 = vmatprep.subr.mxu0 0.0
    %1250 = vmatpush1.msra.mxu0 0.0
    %1251 = vmatprep.subr.mxu0 0.0
    %1252 = vmatpush1.msra.mxu0 0.0
    %1253 = vmatprep.subr.mxu0 0.0
    %1254 = vmatpush1.msra.mxu0 0.0
    %1255 = vmatprep.subr.mxu0 0.0
    %1256 = vmatpush1.msra.mxu0 0.0
    %1257 = vmatprep.subr.mxu0 0.0
    %1258 = vmatpush1.msra.mxu0 0.0
    %1259 = vmatprep.subr.mxu0 0.0
    %1260 = vmatpush1.msra.mxu0 0.0
    %1261 = vmatprep.subr.mxu0 0.0
    %1262 = vmatpush1.msra.mxu0 0.0
    %1263 = vmatprep.subr.mxu0 0.0
    %1264 = vmatpush1.msra.mxu0 0.0
    %1265 = vmatprep.subr.mxu0 0.0
    %1266 = vmatpush1.msra.mxu0 0.0
    %1267 = vmatprep.subr.mxu0 0.0
    %1268 = vmatpush1.msra.mxu0 0.0
    %1269 = vmatprep.subr.mxu0 0.0
    %1270 = vmatpush1.msra.mxu0 0.0
    %1271 = vmatprep.mubr.f32.mxu0 0.0
    %1272 = vmatmul.mubr.f32.gmra.mrb[0].mxu0 %v1135
    %v1273 = vpop.f32.mrb[0].mxu0
    %v1274 = vadd.f32 0.0, %v1273
    %v1275 = vpop.f32.mrb[0].mxu0
    %v1276 = vadd.f32 0.0, %v1275
    %1277 = vdwg.mxu0
    %v1278 = vadd.f32 %v262, %v1203
    %v1279 = vadd.f32 %v263, %v1205
    %v1280 = vadd.f32 %v264, %v1274
    %v1281 = vadd.f32 %v265, %v1276
    %v1282 = vxor.u32 %v1278, 2147483648
    %v1283 = vmul.f32 %v1282, 1.442695
    %v1284 = vpow.pop %v1283
    %v1285 = vadd.f32 %v1284, 1.0
    %v1286 = vrcp.pop %v1285
    %v1287 = vmul.f32 1.0, %v1286
    %v1288 = vtanh.pop %v1280
    %v1289 = vxor.u32 %v1281, 2147483648
    %v1290 = vmul.f32 %v1289, 1.442695
    %v1291 = vpow.pop %v1290
    %v1292 = vadd.f32 %v1291, 1.0
    %v1293 = vrcp.pop %v1292
    %v1294 = vmul.f32 1.0, %v1293
    %v1295 = vxor.u32 %v1279, 2147483648
    %v1296 = vmul.f32 %v1295, 1.442695
    %v1297 = vpow.pop %v1296
    %v1298 = vadd.f32 %v1297, 1.0
    %v1299 = vrcp.pop %v1298
    %v1300 = vmul.f32 1.0, %v1299
    %v1301 = vmul.f32 %v1300, %v1133
    %v1302 = vmul.f32 %v1287, %v1288
    %v1303 = vadd.f32 %v1301, %v1302
    %v1304 = vtanh.pop %v1303
    %v1305 = vmul.f32 %v1294, %v1304
    %1306 = vmatprep.subr.mxu0 %v47
    %1307 = vmatpush1.msra.mxu0 %v46
    %1308 = vmatprep.subr.mxu0 %v51
    %1309 = vmatpush1.msra.mxu0 %v50
    %1310 = vmatprep.subr.mxu0 %v55
    %1311 = vmatpush1.msra.mxu0 %v54
    %1312 = vmatprep.subr.mxu0 %v59
    %1313 = vmatpush1.msra.mxu0 %v58
    %1314 = vmatprep.subr.mxu0 %v63
    %1315 = vmatpush1.msra.mxu0 %v62
    %1316 = vmatprep.subr.mxu0 %v67
    %1317 = vmatpush1.msra.mxu0 %v66
    %1318 = vmatprep.subr.mxu0 %v71
    %1319 = vmatpush1.msra.mxu0 %v70
    %1320 = vmatprep.subr.mxu0 %v75
    %1321 = vmatpush1.msra.mxu0 %v74
    %1322 = vmatprep.subr.mxu0 %v79
    %1323 = vmatpush1.msra.mxu0 %v78
    %1324 = vmatprep.subr.mxu0 %v83
    %1325 = vmatpush1.msra.mxu0 %v82
    %1326 = vmatprep.subr.mxu0 %v87
    %1327 = vmatpush1.msra.mxu0 %v86
    %1328 = vmatprep.subr.mxu0 %v91
    %1329 = vmatpush1.msra.mxu0 %v90
    %1330 = vmatprep.subr.mxu0 %v95
    %1331 = vmatpush1.msra.mxu0 %v94
    %1332 = vmatprep.subr.mxu0 %v99
    %1333 = vmatpush1.msra.mxu0 %v98
    %1334 = vmatprep.subr.mxu0 %v103
    %1335 = vmatpush1.msra.mxu0 %v102
    %1336 = vmatprep.subr.mxu0 %v107
    %1337 = vmatpush1.msra.mxu0 %v106
    %1338 = vmatprep.subr.mxu0 0.0
    %1339 = vmatpush1.msra.mxu0 0.0
    %1340 = vmatprep.subr.mxu0 0.0
    %1341 = vmatpush1.msra.mxu0 0.0
    %1342 = vmatprep.subr.mxu0 0.0
    %1343 = vmatpush1.msra.mxu0 0.0
    %1344 = vmatprep.subr.mxu0 0.0
    %1345 = vmatpush1.msra.mxu0 0.0
    %1346 = vmatprep.subr.mxu0 0.0
    %1347 = vmatpush1.msra.mxu0 0.0
    %1348 = vmatprep.subr.mxu0 0.0
    %1349 = vmatpush1.msra.mxu0 0.0
    %1350 = vmatprep.subr.mxu0 0.0
    %1351 = vmatpush1.msra.mxu0 0.0
    %1352 = vmatprep.subr.mxu0 0.0
    %1353 = vmatpush1.msra.mxu0 0.0
    %1354 = vmatprep.subr.mxu0 0.0
    %1355 = vmatpush1.msra.mxu0 0.0
    %1356 = vmatprep.subr.mxu0 0.0
    %1357 = vmatpush1.msra.mxu0 0.0
    %1358 = vmatprep.subr.mxu0 0.0
    %1359 = vmatpush1.msra.mxu0 0.0
    %1360 = vmatprep.subr.mxu0 0.0
    %1361 = vmatpush1.msra.mxu0 0.0
    %1362 = vmatprep.subr.mxu0 0.0
    %1363 = vmatpush1.msra.mxu0 0.0
    %1364 = vmatprep.subr.mxu0 0.0
    %1365 = vmatpush1.msra.mxu0 0.0
    %1366 = vmatprep.subr.mxu0 0.0
    %1367 = vmatpush1.msra.mxu0 0.0
    %1368 = vmatprep.subr.mxu0 0.0
    %1369 = vmatpush1.msra.mxu0 0.0
    %1370 = vmatprep.mubr.f32.mxu0 0.0
    %1371 = vmatmul.mubr.f32.gmra.mrb[0].mxu0 %v1305
    %v1372 = vpop.f32.mrb[0].mxu0
    %v1373 = vadd.f32 0.0, %v1372
    %v1374 = vpop.f32.mrb[0].mxu0
    %v1375 = vadd.f32 0.0, %v1374
    %1376 = vdwg.mxu0
    %1377 = vmatprep.subr.mxu0 %v49
    %1378 = vmatpush1.msra.mxu0 %v48
    %1379 = vmatprep.subr.mxu0 %v53
    %1380 = vmatpush1.msra.mxu0 %v52
    %1381 = vmatprep.subr.mxu0 %v57
    %1382 = vmatpush1.msra.mxu0 %v56
    %1383 = vmatprep.subr.mxu0 %v61
    %1384 = vmatpush1.msra.mxu0 %v60
    %1385 = vmatprep.subr.mxu0 %v65
    %1386 = vmatpush1.msra.mxu0 %v64
    %1387 = vmatprep.subr.mxu0 %v69
    %1388 = vmatpush1.msra.mxu0 %v68
    %1389 = vmatprep.subr.mxu0 %v73
    %1390 = vmatpush1.msra.mxu0 %v72
    %1391 = vmatprep.subr.mxu0 %v77
    %1392 = vmatpush1.msra.mxu0 %v76
    %1393 = vmatprep.subr.mxu0 %v81
    %1394 = vmatpush1.msra.mxu0 %v80
    %1395 = vmatprep.subr.mxu0 %v85
    %1396 = vmatpush1.msra.mxu0 %v84
    %1397 = vmatprep.subr.mxu0 %v89
    %1398 = vmatpush1.msra.mxu0 %v88
    %1399 = vmatprep.subr.mxu0 %v93
    %1400 = vmatpush1.msra.mxu0 %v92
    %1401 = vmatprep.subr.mxu0 %v97
    %1402 = vmatpush1.msra.mxu0 %v96
    %1403 = vmatprep.subr.mxu0 %v101
    %1404 = vmatpush1.msra.mxu0 %v100
    %1405 = vmatprep.subr.mxu0 %v105
    %1406 = vmatpush1.msra.mxu0 %v104
    %1407 = vmatprep.subr.mxu0 %v109
    %1408 = vmatpush1.msra.mxu0 %v108
    %1409 = vmatprep.subr.mxu0 0.0
    %1410 = vmatpush1.msra.mxu0 0.0
    %1411 = vmatprep.subr.mxu0 0.0
    %1412 = vmatpush1.msra.mxu0 0.0
    %1413 = vmatprep.subr.mxu0 0.0
    %1414 = vmatpush1.msra.mxu0 0.0
    %1415 = vmatprep.subr.mxu0 0.0
    %1416 = vmatpush1.msra.mxu0 0.0
    %1417 = vmatprep.subr.mxu0 0.0
    %1418 = vmatpush1.msra.mxu0 0.0
    %1419 = vmatprep.subr.mxu0 0.0
    %1420 = vmatpush1.msra.mxu0 0.0
    %1421 = vmatprep.subr.mxu0 0.0
    %1422 = vmatpush1.msra.mxu0 0.0
    %1423 = vmatprep.subr.mxu0 0.0
    %1424 = vmatpush1.msra.mxu0 0.0
    %1425 = vmatprep.subr.mxu0 0.0
    %1426 = vmatpush1.msra.mxu0 0.0
    %1427 = vmatprep.subr.mxu0 0.0
    %1428 = vmatpush1.msra.mxu0 0.0
    %1429 = vmatprep.subr.mxu0 0.0
    %1430 = vmatpush1.msra.mxu0 0.0
    %1431 = vmatprep.subr.mxu0 0.0
    %1432 = vmatpush1.msra.mxu0 0.0
    %1433 = vmatprep.subr.mxu0 0.0
    %1434 = vmatpush1.msra.mxu0 0.0
    %1435 = vmatprep.subr.mxu0 0.0
    %1436 = vmatpush1.msra.mxu0 0.0
    %1437 = vmatprep.subr.mxu0 0.0
    %1438 = vmatpush1.msra.mxu0 0.0
    %1439 = vmatprep.subr.mxu0 0.0
    %1440 = vmatpush1.msra.mxu0 0.0
    %1441 = vmatprep.mubr.f32.mxu0 0.0
    %1442 = vmatmul.mubr.f32.gmra.mrb[0].mxu0 %v1305
    %v1443 = vpop.f32.mrb[0].mxu0
    %v1444 = vadd.f32 0.0, %v1443
    %v1445 = vpop.f32.mrb[0].mxu0
    %v1446 = vadd.f32 0.0, %v1445
    %1447 = vdwg.mxu0
    %v1448 = vadd.f32 %v266, %v1373
    %v1449 = vadd.f32 %v267, %v1375
    %v1450 = vadd.f32 %v268, %v1444
    %v1451 = vadd.f32 %v269, %v1446
    %v1452 = vxor.u32 %v1448, 2147483648
    %v1453 = vmul.f32 %v1452, 1.442695
    %v1454 = vpow.pop %v1453
    %v1455 = vadd.f32 %v1454, 1.0
    %v1456 = vrcp.pop %v1455
    %v1457 = vmul.f32 1.0, %v1456
    %v1458 = vtanh.pop %v1450
    %v1459 = vxor.u32 %v1451, 2147483648
    %v1460 = vmul.f32 %v1459, 1.442695
    %v1461 = vpow.pop %v1460
    %v1462 = vadd.f32 %v1461, 1.0
    %v1463 = vrcp.pop %v1462
    %v1464 = vmul.f32 1.0, %v1463
    %v1465 = vxor.u32 %v1449, 2147483648
    %v1466 = vmul.f32 %v1465, 1.442695
    %v1467 = vpow.pop %v1466
    %v1468 = vadd.f32 %v1467, 1.0
    %v1469 = vrcp.pop %v1468
    %v1470 = vmul.f32 1.0, %v1469
    %v1471 = vmul.f32 %v1470, %v1303
    %v1472 = vmul.f32 %v1457, %v1458
    %v1473 = vadd.f32 %v1471, %v1472
    %v1474 = vtanh.pop %v1473
    %v1475 = vmul.f32 %v1464, %v1474
    %v1477 = vlaneseq
    %v1478 = vshrl.u32 %v1477, 7
    %v1479 = vsub.s32 0, %v1478
    %v1480 = vrot.slane %v115, %v1479
    %v1481 = vlaneseq
    %v1482 = vshrl.u32 %v1481, 7
    %v1483 = vsub.s32 2, %v1482
    %v1484 = vrot.slane %v115, %v1483
    %v1485 = vlaneseq
    %v1486 = vshrl.u32 %v1485, 7
    %v1487 = vsub.s32 3, %v1486
    %v1488 = vrot.slane %v115, %v1487
    %v1492 = vmul.f32 %v164, %v1480
    %v1493 = vmul.f32 %v164, %v1484
    %v1494 = vmul.f32 %v164, %v1488
    %v1496 = vlaneseq
    %v1497 = vshrl.u32 %v1496, 7
    %v1498 = vsub.s32 0, %v1497
    %v1499 = vrot.slane %v117, %v1498
    %v1500 = vlaneseq
    %v1501 = vshrl.u32 %v1500, 7
    %v1502 = vsub.s32 2, %v1501
    %v1503 = vrot.slane %v117, %v1502
    %v1504 = vlaneseq
    %v1505 = vshrl.u32 %v1504, 7
    %v1506 = vsub.s32 3, %v1505
    %v1507 = vrot.slane %v117, %v1506
    %v1511 = vadd.f32 %v1492, %v1499
    %v1512 = vadd.f32 %v1493, %v1503
    %v1513 = vadd.f32 %v1494, %v1507
    %v1514 = vxor.u32 %v1511, 2147483648
    %v1515 = vmul.f32 %v1514, 1.442695
    %v1516 = vpow.pop %v1515
    %v1517 = vadd.f32 %v1516, 1.0
    %v1518 = vrcp.pop %v1517
    %v1519 = vmul.f32 1.0, %v1518
    %v1520 = vtanh.pop %v1512
    %v1521 = vxor.u32 %v1513, 2147483648
    %v1522 = vmul.f32 %v1521, 1.442695
    %v1523 = vpow.pop %v1522
    %v1524 = vadd.f32 %v1523, 1.0
    %v1525 = vrcp.pop %v1524
    %v1526 = vmul.f32 1.0, %v1525
    %v1527 = vmul.f32 %v1519, %v1520
    %v1528 = vtanh.pop %v1527
    %v1529 = vmul.f32 %v1526, %v1528
    %v1530 = vld [vmem:[#allocation5] sm:$0xff]
    %v1531 = vld [vmem:[#allocation5 + $0x20] sm:$0xff]
    %v1532 = vld [vmem:[#allocation5 + $0x40] sm:$0xff]
    %v1533 = vld [vmem:[#allocation5 + $0x60] sm:$0xff]
    %v1534 = vld [vmem:[#allocation5 + $0x80] sm:$0xff]
    %v1535 = vld [vmem:[#allocation5 + $0xa0] sm:$0xff]
    %v1536 = vld [vmem:[#allocation5 + $0xc0] sm:$0xff]
    %v1537 = vld [vmem:[#allocation5 + $0xe0] sm:$0xff]
    %v1538 = vld [vmem:[#allocation5 + $0x100] sm:$0xff]
    %v1539 = vld [vmem:[#allocation5 + $0x120] sm:$0xff]
    %v1540 = vld [vmem:[#allocation5 + $0x140] sm:$0xff]
    %v1541 = vld [vmem:[#allocation5 + $0x160] sm:$0xff]
    %v1542 = vld [vmem:[#allocation5 + $0x180] sm:$0xff]
    %v1543 = vld [vmem:[#allocation5 + $0x1a0] sm:$0xff]
    %v1544 = vld [vmem:[#allocation5 + $0x1c0] sm:$0xff]
    %v1545 = vld [vmem:[#allocation5 + $0x1e0] sm:$0xff]
    %v1546 = vld [vmem:[#allocation5 + $0x8] sm:$0xff]
    %v1547 = vld [vmem:[#allocation5 + $0x28] sm:$0xff]
    %v1548 = vld [vmem:[#allocation5 + $0x48] sm:$0xff]
    %v1549 = vld [vmem:[#allocation5 + $0x68] sm:$0xff]
    %v1550 = vld [vmem:[#allocation5 + $0x88] sm:$0xff]
    %v1551 = vld [vmem:[#allocation5 + $0xa8] sm:$0xff]
    %v1552 = vld [vmem:[#allocation5 + $0xc8] sm:$0xff]
    %v1553 = vld [vmem:[#allocation5 + $0xe8] sm:$0xff]
    %v1554 = vld [vmem:[#allocation5 + $0x108] sm:$0xff]
    %v1555 = vld [vmem:[#allocation5 + $0x128] sm:$0xff]
    %v1556 = vld [vmem:[#allocation5 + $0x148] sm:$0xff]
    %v1557 = vld [vmem:[#allocation5 + $0x168] sm:$0xff]
    %v1558 = vld [vmem:[#allocation5 + $0x188] sm:$0xff]
    %v1559 = vld [vmem:[#allocation5 + $0x1a8] sm:$0xff]
    %v1560 = vld [vmem:[#allocation5 + $0x1c8] sm:$0xff]
    %v1561 = vld [vmem:[#allocation5 + $0x1e8] sm:$0xff]
    %v1562 = vld [vmem:[#allocation5 + $0x10] sm:$0xff]
    %v1563 = vld [vmem:[#allocation5 + $0x18] sm:$0xff]
    %v1564 = vld [vmem:[#allocation5 + $0x30] sm:$0xff]
    %v1565 = vld [vmem:[#allocation5 + $0x38] sm:$0xff]
    %v1566 = vld [vmem:[#allocation5 + $0x50] sm:$0xff]
    %v1567 = vld [vmem:[#allocation5 + $0x58] sm:$0xff]
    %v1568 = vld [vmem:[#allocation5 + $0x70] sm:$0xff]
    %v1569 = vld [vmem:[#allocation5 + $0x78] sm:$0xff]
    %v1570 = vld [vmem:[#allocation5 + $0x90] sm:$0xff]
    %v1571 = vld [vmem:[#allocation5 + $0x98] sm:$0xff]
    %v1572 = vld [vmem:[#allocation5 + $0xb0] sm:$0xff]
    %v1573 = vld [vmem:[#allocation5 + $0xb8] sm:$0xff]
    %v1574 = vld [vmem:[#allocation5 + $0xd0] sm:$0xff]
    %v1575 = vld [vmem:[#allocation5 + $0xd8] sm:$0xff]
    %v1576 = vld [vmem:[#allocation5 + $0xf0] sm:$0xff]
    %v1577 = vld [vmem:[#allocation5 + $0xf8] sm:$0xff]
    %v1578 = vld [vmem:[#allocation5 + $0x110] sm:$0xff]
    %v1579 = vld [vmem:[#allocation5 + $0x118] sm:$0xff]
    %v1580 = vld [vmem:[#allocation5 + $0x130] sm:$0xff]
    %v1581 = vld [vmem:[#allocation5 + $0x138] sm:$0xff]
    %v1582 = vld [vmem:[#allocation5 + $0x150] sm:$0xff]
    %v1583 = vld [vmem:[#allocation5 + $0x158] sm:$0xff]
    %v1584 = vld [vmem:[#allocation5 + $0x170] sm:$0xff]
    %v1585 = vld [vmem:[#allocation5 + $0x178] sm:$0xff]
    %v1586 = vld [vmem:[#allocation5 + $0x190] sm:$0xff]
    %v1587 = vld [vmem:[#allocation5 + $0x198] sm:$0xff]
    %v1588 = vld [vmem:[#allocation5 + $0x1b0] sm:$0xff]
    %v1589 = vld [vmem:[#allocation5 + $0x1b8] sm:$0xff]
    %v1590 = vld [vmem:[#allocation5 + $0x1d0] sm:$0xff]
    %v1591 = vld [vmem:[#allocation5 + $0x1d8] sm:$0xff]
    %v1592 = vld [vmem:[#allocation5 + $0x1f0] sm:$0xff]
    %v1593 = vld [vmem:[#allocation5 + $0x1f8] sm:$0xff]
    %v1594 = vld [vmem:[#allocation5 + $0x200] ss:$0 sm:$0xff]
    %v1595 = vld [vmem:[#allocation5 + $0x208] ss:$0 sm:$0xff]
    %v1596 = vld [vmem:[#allocation5 + $0x210] ss:$0 sm:$0xff]
    %1597 = vmatprep.subr.mxu0 0.0
    %1598 = vmatpush1.msra.mxu0 %v1546
    %1599 = vmatprep.subr.mxu0 0.0
    %1600 = vmatpush1.msra.mxu0 %v1547
    %1601 = vmatprep.subr.mxu0 0.0
    %1602 = vmatpush1.msra.mxu0 %v1548
    %1603 = vmatprep.subr.mxu0 0.0
    %1604 = vmatpush1.msra.mxu0 %v1549
    %1605 = vmatprep.subr.mxu0 0.0
    %1606 = vmatpush1.msra.mxu0 %v1550
    %1607 = vmatprep.subr.mxu0 0.0
    %1608 = vmatpush1.msra.mxu0 %v1551
    %1609 = vmatprep.subr.mxu0 0.0
    %1610 = vmatpush1.msra.mxu0 %v1552
    %1611 = vmatprep.subr.mxu0 0.0
    %1612 = vmatpush1.msra.mxu0 %v1553
    %1613 = vmatprep.subr.mxu0 0.0
    %1614 = vmatpush1.msra.mxu0 %v1554
    %1615 = vmatprep.subr.mxu0 0.0
    %1616 = vmatpush1.msra.mxu0 %v1555
    %1617 = vmatprep.subr.mxu0 0.0
    %1618 = vmatpush1.msra.mxu0 %v1556
    %1619 = vmatprep.subr.mxu0 0.0
    %1620 = vmatpush1.msra.mxu0 %v1557
    %1621 = vmatprep.subr.mxu0 0.0
    %1622 = vmatpush1.msra.mxu0 %v1558
    %1623 = vmatprep.subr.mxu0 0.0
    %1624 = vmatpush1.msra.mxu0 %v1559
    %1625 = vmatprep.subr.mxu0 0.0
    %1626 = vmatpush1.msra.mxu0 %v1560
    %1627 = vmatprep.subr.mxu0 0.0
    %1628 = vmatpush1.msra.mxu0 %v1561
    %1629 = vmatprep.subr.mxu0 0.0
    %1630 = vmatpush1.msra.mxu0 0.0
    %1631 = vmatprep.subr.mxu0 0.0
    %1632 = vmatpush1.msra.mxu0 0.0
    %1633 = vmatprep.subr.mxu0 0.0
    %1634 = vmatpush1.msra.mxu0 0.0
    %1635 = vmatprep.subr.mxu0 0.0
    %1636 = vmatpush1.msra.mxu0 0.0
    %1637 = vmatprep.subr.mxu0 0.0
    %1638 = vmatpush1.msra.mxu0 0.0
    %1639 = vmatprep.subr.mxu0 0.0
    %1640 = vmatpush1.msra.mxu0 0.0
    %1641 = vmatprep.subr.mxu0 0.0
    %1642 = vmatpush1.msra.mxu0 0.0
    %1643 = vmatprep.subr.mxu0 0.0
    %1644 = vmatpush1.msra.mxu0 0.0
    %1645 = vmatprep.subr.mxu0 0.0
    %1646 = vmatpush1.msra.mxu0 0.0
    %1647 = vmatprep.subr.mxu0 0.0
    %1648 = vmatpush1.msra.mxu0 0.0
    %1649 = vmatprep.subr.mxu0 0.0
    %1650 = vmatpush1.msra.mxu0 0.0
    %1651 = vmatprep.subr.mxu0 0.0
    %1652 = vmatpush1.msra.mxu0 0.0
    %1653 = vmatprep.subr.mxu0 0.0
    %1654 = vmatpush1.msra.mxu0 0.0
    %1655 = vmatprep.subr.mxu0 0.0
    %1656 = vmatpush1.msra.mxu0 0.0
    %1657 = vmatprep.subr.mxu0 0.0
    %1658 = vmatpush1.msra.mxu0 0.0
    %1659 = vmatprep.subr.mxu0 0.0
    %1660 = vmatpush1.msra.mxu0 0.0
    %1661 = vmatprep.mubr.f32.mxu0 0.0
    %1662 = vmatmul.mubr.f32.gmra.mrb[0].mxu0 %v1529
    %v1663 = vpop.f32.mrb[0].mxu0
    %v1664 = vadd.f32 0.0, %v1663
    %v1665 = vpop.f32.mrb[0].mxu0
    %1666 = vdwg.mxu0
    %1667 = vmatprep.subr.mxu0 0.0
    %1668 = vmatpush1.msra.mxu0 %v1530
    %1669 = vmatprep.subr.mxu0 0.0
    %1670 = vmatpush1.msra.mxu0 %v1531
    %1671 = vmatprep.subr.mxu0 0.0
    %1672 = vmatpush1.msra.mxu0 %v1532
    %1673 = vmatprep.subr.mxu0 0.0
    %1674 = vmatpush1.msra.mxu0 %v1533
    %1675 = vmatprep.subr.mxu0 0.0
    %1676 = vmatpush1.msra.mxu0 %v1534
    %1677 = vmatprep.subr.mxu0 0.0
    %1678 = vmatpush1.msra.mxu0 %v1535
    %1679 = vmatprep.subr.mxu0 0.0
    %1680 = vmatpush1.msra.mxu0 %v1536
    %1681 = vmatprep.subr.mxu0 0.0
    %1682 = vmatpush1.msra.mxu0 %v1537
    %1683 = vmatprep.subr.mxu0 0.0
    %1684 = vmatpush1.msra.mxu0 %v1538
    %1685 = vmatprep.subr.mxu0 0.0
    %1686 = vmatpush1.msra.mxu0 %v1539
    %1687 = vmatprep.subr.mxu0 0.0
    %1688 = vmatpush1.msra.mxu0 %v1540
    %1689 = vmatprep.subr.mxu0 0.0
    %1690 = vmatpush1.msra.mxu0 %v1541
    %1691 = vmatprep.subr.mxu0 0.0
    %1692 = vmatpush1.msra.mxu0 %v1542
    %1693 = vmatprep.subr.mxu0 0.0
    %1694 = vmatpush1.msra.mxu0 %v1543
    %1695 = vmatprep.subr.mxu0 0.0
    %1696 = vmatpush1.msra.mxu0 %v1544
    %1697 = vmatprep.subr.mxu0 0.0
    %1698 = vmatpush1.msra.mxu0 %v1545
    %1699 = vmatprep.subr.mxu0 0.0
    %1700 = vmatpush1.msra.mxu0 0.0
    %1701 = vmatprep.subr.mxu0 0.0
    %1702 = vmatpush1.msra.mxu0 0.0
    %1703 = vmatprep.subr.mxu0 0.0
    %1704 = vmatpush1.msra.mxu0 0.0
    %1705 = vmatprep.subr.mxu0 0.0
    %1706 = vmatpush1.msra.mxu0 0.0
    %1707 = vmatprep.subr.mxu0 0.0
    %1708 = vmatpush1.msra.mxu0 0.0
    %1709 = vmatprep.subr.mxu0 0.0
    %1710 = vmatpush1.msra.mxu0 0.0
    %1711 = vmatprep.subr.mxu0 0.0
    %1712 = vmatpush1.msra.mxu0 0.0
    %1713 = vmatprep.subr.mxu0 0.0
    %1714 = vmatpush1.msra.mxu0 0.0
    %1715 = vmatprep.subr.mxu0 0.0
    %1716 = vmatpush1.msra.mxu0 0.0
    %1717 = vmatprep.subr.mxu0 0.0
    %1718 = vmatpush1.msra.mxu0 0.0
    %1719 = vmatprep.subr.mxu0 0.0
    %1720 = vmatpush1.msra.mxu0 0.0
    %1721 = vmatprep.subr.mxu0 0.0
    %1722 = vmatpush1.msra.mxu0 0.0
    %1723 = vmatprep.subr.mxu0 0.0
    %1724 = vmatpush1.msra.mxu0 0.0
    %1725 = vmatprep.subr.mxu0 0.0
    %1726 = vmatpush1.msra.mxu0 0.0
    %1727 = vmatprep.subr.mxu0 0.0
    %1728 = vmatpush1.msra.mxu0 0.0
    %1729 = vmatprep.subr.mxu0 0.0
    %1730 = vmatpush1.msra.mxu0 0.0
    %1731 = vmatprep.mubr.f32.mxu0 0.0
    %1732 = vmatmul.mubr.f32.gmra.mrb[0].mxu0 %v1475
    %v1733 = vpop.f32.mrb[0].mxu0
    %v1734 = vadd.f32 %v1664, %v1733
    %v1735 = vpop.f32.mrb[0].mxu0
    %1736 = vdwg.mxu0
    %v1737 = vadd.f32 %v1734, %v1594
    %v1738 = vmax.f32 %v1737, 0.0
    %1739 = vmatprep.subr.mxu0 %v1563
    %1740 = vmatpush1.msra.mxu0 %v1562
    %1741 = vmatprep.subr.mxu0 %v1565
    %1742 = vmatpush1.msra.mxu0 %v1564
    %1743 = vmatprep.subr.mxu0 %v1567
    %1744 = vmatpush1.msra.mxu0 %v1566
    %1745 = vmatprep.subr.mxu0 %v1569
    %1746 = vmatpush1.msra.mxu0 %v1568
    %1747 = vmatprep.subr.mxu0 %v1571
    %1748 = vmatpush1.msra.mxu0 %v1570
    %1749 = vmatprep.subr.mxu0 %v1573
    %1750 = vmatpush1.msra.mxu0 %v1572
    %1751 = vmatprep.subr.mxu0 %v1575
    %1752 = vmatpush1.msra.mxu0 %v1574
    %1753 = vmatprep.subr.mxu0 %v1577
    %1754 = vmatpush1.msra.mxu0 %v1576
    %1755 = vmatprep.subr.mxu0 %v1579
    %1756 = vmatpush1.msra.mxu0 %v1578
    %1757 = vmatprep.subr.mxu0 %v1581
    %1758 = vmatpush1.msra.mxu0 %v1580
    %1759 = vmatprep.subr.mxu0 %v1583
    %1760 = vmatpush1.msra.mxu0 %v1582
    %1761 = vmatprep.subr.mxu0 %v1585
    %1762 = vmatpush1.msra.mxu0 %v1584
    %1763 = vmatprep.subr.mxu0 %v1587
    %1764 = vmatpush1.msra.mxu0 %v1586
    %1765 = vmatprep.subr.mxu0 %v1589
    %1766 = vmatpush1.msra.mxu0 %v1588
    %1767 = vmatprep.subr.mxu0 %v1591
    %1768 = vmatpush1.msra.mxu0 %v1590
    %1769 = vmatprep.subr.mxu0 %v1593
    %1770 = vmatpush1.msra.mxu0 %v1592
    %1771 = vmatprep.subr.mxu0 0.0
    %1772 = vmatpush1.msra.mxu0 0.0
    %1773 = vmatprep.subr.mxu0 0.0
    %1774 = vmatpush1.msra.mxu0 0.0
    %1775 = vmatprep.subr.mxu0 0.0
    %1776 = vmatpush1.msra.mxu0 0.0
    %1777 = vmatprep.subr.mxu0 0.0
    %1778 = vmatpush1.msra.mxu0 0.0
    %1779 = vmatprep.subr.mxu0 0.0
    %1780 = vmatpush1.msra.mxu0 0.0
    %1781 = vmatprep.subr.mxu0 0.0
    %1782 = vmatpush1.msra.mxu0 0.0
    %1783 = vmatprep.subr.mxu0 0.0
    %1784 = vmatpush1.msra.mxu0 0.0
    %1785 = vmatprep.subr.mxu0 0.0
    %1786 = vmatpush1.msra.mxu0 0.0
    %1787 = vmatprep.subr.mxu0 0.0
    %1788 = vmatpush1.msra.mxu0 0.0
    %1789 = vmatprep.subr.mxu0 0.0
    %1790 = vmatpush1.msra.mxu0 0.0
    %1791 = vmatprep.subr.mxu0 0.0
    %1792 = vmatpush1.msra.mxu0 0.0
    %1793 = vmatprep.subr.mxu0 0.0
    %1794 = vmatpush1.msra.mxu0 0.0
    %1795 = vmatprep.subr.mxu0 0.0
    %1796 = vmatpush1.msra.mxu0 0.0
    %1797 = vmatprep.subr.mxu0 0.0
    %1798 = vmatpush1.msra.mxu0 0.0
    %1799 = vmatprep.subr.mxu0 0.0
    %1800 = vmatpush1.msra.mxu0 0.0
    %1801 = vmatprep.subr.mxu0 0.0
    %1802 = vmatpush1.msra.mxu0 0.0
    %1803 = vmatprep.mubr.f32.mxu0 0.0
    %1804 = vmatmul.mubr.f32.gmra.mrb[0].mxu0 %v1738
    %v1805 = vpop.f32.mrb[0].mxu0
    %v1806 = vadd.f32 0.0, %v1805
    %v1807 = vpop.f32.mrb[0].mxu0
    %v1808 = vadd.f32 0.0, %v1807
    %1809 = vdwg.mxu0
    %v1810 = vadd.f32 %v1806, %v1595
    %v1811 = vadd.f32 %v1808, %v1596
    %v1812 = vld [vmem:[%s1] sm:$0xff]
    %v1813 = vmul.f32 %v1811, 0.5
    %v1814 = vmul.f32 %v1813, 1.442695
    %v1815 = vpow.pop %v1814
    %v1816 = vmul.f32 %v1812, %v1815
    %v1817 = vadd.f32 %v1816, %v1810
    %1818 = vst [vmem:[#allocation7] sm:$0xff] %v1817
    %1819 = vst [vmem:[#allocation7 + $0x8] sm:$0xff] %v1810
    %1820 = vst [vmem:[#allocation7 + $0x10] sm:$0xff] %v1811
    // Predicated region
    $region26: #{tpu_custom_call.1} parent=1 // pred_check
      _
    $region27: #{tpu_custom_call.1} parent=1 // pred_check_branch
      %1822 = sbr.rel (0) target = $region29
    $region28: #{tpu_custom_call.1} parent=1 // pred_region
      %s1824 = ssub.s32 384, 384
      %1825 = vsyncadd [#allocation4], %s1824
      %s1827 = sshll.u32 [#allocation7], 4
      %s1828 = int_to_ptr.vmem [resolvable:$true] %s1827
      %1830 = dma.vmem_to_hbm [thread:$0]  %s1828, 384, %s4, [#allocation4]
    $region29: #{tpu_custom_call.1} parent=1 // pred_fallthru
      _
    // Predicated region
    $region30: #{tpu_custom_call.1} parent=1 // pred_check
      _
    $region31: #{tpu_custom_call.1} parent=1 // pred_check_branch
      %1832 = sbr.rel (0) target = $region33
    $region32: #{tpu_custom_call.1} parent=1 // pred_region
      %1833 = dma.done [#allocation4], 384
    $region33: #{tpu_custom_call.1} parent=1 // pred_fallthru
      _
    %1834 = vsyncpa [#allocation3], 1
    %1835 = vsyncpa [#allocation6], 1
    %1836 = vsyncpa [#allocation4], 1

</llo_original>
